<compile_context>
chip_gen: v7x
topology: tpu7x:2x2x1
jax: 0.10.0
libtpu: 0.0.40
codegen_flags: <defaults>
</compile_context>

<pallas_src>
import functools

import jax
import jax.numpy as jnp
from jax.experimental import pallas as pl
from jax.experimental.pallas import tpu as pltpu


VMEM_LIMIT_BYTES = 32 * 1024 * 1024
_K_ALIGN = 16  # bf16-friendly alignment for the matmul reduction dimension


# ---------------------------------------------------------------------------
# small helpers
# ---------------------------------------------------------------------------
def _round_up(x, m):
    return ((x + m - 1) // m) * m


def _pick_row_tile(mp, cap=512):
    """Largest multiple-of-8 tile <= cap that evenly divides mp (mp % 8 == 0)."""
    hi = min(cap, mp)
    hi -= hi % 8
    for d in range(hi, 7, -8):
        if mp % d == 0:
            return d
    return 8


def _pick_tk(k):
    """Full K (single reduction step) when small; else a 128-multiple divisor."""
    if k <= 2304:
        return k
    for cand in (2304, 2048, 1536, 1152, 1024, 768, 640, 512, 384, 256, 128):
        if k % cand == 0:
            return cand
    return None


def _pick_tn(n):
    if n <= 512:
        return n
    for cand in (512, 256, 128):
        if n % cand == 0:
            return cand
    return None


# ---------------------------------------------------------------------------
# Pallas kernels
# ---------------------------------------------------------------------------
def _fused_matmul_kernel(*refs, has_scale, has_residual, relu):
    """acc += a @ w (bf16 -> f32); final-k epilogue: *scale + shift [+res] [relu]."""
    a_ref, w_ref = refs[0], refs[1]
    pos = 2
    scale_ref = None
    res_ref = None
    if has_scale:
        scale_ref = refs[pos]
        pos += 1
    shift_ref = refs[pos]
    pos += 1
    if has_residual:
        res_ref = refs[pos]
        pos += 1
    o_ref, acc_ref = refs[pos], refs[pos + 1]

    @pl.when(pl.program_id(2) == 0)
    def _init():
        acc_ref[...] = jnp.zeros_like(acc_ref)

    acc_ref[...] += jnp.dot(a_ref[...], w_ref[...],
                            preferred_element_type=jnp.float32)

    @pl.when(pl.program_id(2) == pl.num_programs(2) - 1)
    def _store():
        y = acc_ref[...]
        if has_scale:
            y = y * scale_ref[...]
        y = y + shift_ref[...]
        if has_residual:
            y = y + res_ref[...].astype(jnp.float32)
        if relu:
            y = jnp.maximum(y, 0.0)
        o_ref[...] = y.astype(o_ref.dtype)


def fused_matmul(a, w, *, shift, scale=None, residual=None, relu=False,
                 out_dtype=jnp.float32, tm_cap=512):
    """out = epilogue(a @ w); a:(M,K) bf16, w:(K,N) bf16, scale/shift:(1,N) f32,
    residual:(M,N).  Returns (M,N) in out_dtype."""
    m0, k0 = a.shape
    k0w, n0 = w.shape
    assert k0 == k0w, (k0, k0w)

    # minimal row padding (rare: M is almost always a multiple of 8 already)
    mp = _round_up(m0, 8)
    if mp != m0:
        a = jnp.pad(a, ((0, mp - m0), (0, 0)))
        if residual is not None:
            residual = jnp.pad(residual, ((0, mp - m0), (0, 0)))

    k = k0
    tk = _pick_tk(k)
    if tk is None:                       # generic fallback (not hit by resnet50)
        kp = _round_up(k, 128)
        a = jnp.pad(a, ((0, 0), (0, kp - k)))
        w = jnp.pad(w, ((0, kp - k), (0, 0)))
        k, tk = kp, 128

    n = n0
    tn = _pick_tn(n)
    if tn is None:                       # generic fallback (not hit by resnet50)
        np_ = _round_up(n, 128)
        w = jnp.pad(w, ((0, 0), (0, np_ - n)))
        shift = jnp.pad(shift, ((0, 0), (0, np_ - n)))
        if scale is not None:
            scale = jnp.pad(scale, ((0, 0), (0, np_ - n)))
        if residual is not None:
            residual = jnp.pad(residual, ((0, 0), (0, np_ - n)))
        n, tn = np_, 128

    tm = _pick_row_tile(mp, tm_cap)
    grid = (mp // tm, n // tn, k // tk)

    has_scale = scale is not None
    has_residual = residual is not None

    in_specs = [pl.BlockSpec((tm, tk), lambda i, j, kk: (i, kk)),
                pl.BlockSpec((tk, tn), lambda i, j, kk: (kk, j))]
    operands = [a, w]
    if has_scale:
        in_specs.append(pl.BlockSpec((1, tn), lambda i, j, kk: (0, j)))
        operands.append(scale)
    in_specs.append(pl.BlockSpec((1, tn), lambda i, j, kk: (0, j)))
    operands.append(shift)
    if has_residual:
        in_specs.append(pl.BlockSpec((tm, tn), lambda i, j, kk: (i, j)))
        operands.append(residual)

    kern = functools.partial(_fused_matmul_kernel, has_scale=has_scale,
                             has_residual=has_residual, relu=relu)
    out = pl.pallas_call(
        kern,
        out_shape=jax.ShapeDtypeStruct((mp, n), out_dtype),
        grid_spec=pltpu.PrefetchScalarGridSpec(
            num_scalar_prefetch=0,
            grid=grid,
            in_specs=in_specs,
            out_specs=pl.BlockSpec((tm, tn), lambda i, j, kk: (i, j)),
            scratch_shapes=[pltpu.VMEM((tm, tn), jnp.float32)]),
        compiler_params=pltpu.CompilerParams(
            dimension_semantics=("parallel", "parallel", "arbitrary"),
            vmem_limit_bytes=VMEM_LIMIT_BYTES),
    )(*operands)
    return out[:m0, :n0]


def _reduce_mid_kernel(x_ref, o_ref, *, op):
    x = x_ref[...].astype(jnp.float32)
    if op == "max":
        r = jnp.max(x, axis=1)
    else:
        r = jnp.mean(x, axis=1)
    o_ref[...] = r.astype(o_ref.dtype)


def reduce_mid(x3d, op, out_dtype):
    """(M, K, C) -> (M, C) reducing the middle axis, row-tiled + parallel grid."""
    m0, kdim, c = x3d.shape
    mp = _round_up(m0, 8)
    if mp != m0:
        x3d = jnp.pad(x3d, ((0, mp - m0), (0, 0), (0, 0)))
    rm = _pick_row_tile(mp, cap=512)
    kern = functools.partial(_reduce_mid_kernel, op=op)
    out = pl.pallas_call(
        kern,
        out_shape=jax.ShapeDtypeStruct((mp, c), out_dtype),
        grid=(mp // rm,),
        in_specs=[pl.BlockSpec((rm, kdim, c), lambda i: (i, 0, 0))],
        out_specs=pl.BlockSpec((rm, c), lambda i: (i, 0)),
        compiler_params=pltpu.CompilerParams(
            dimension_semantics=("parallel",),
            vmem_limit_bytes=VMEM_LIMIT_BYTES),
    )(x3d)
    return out[:m0]


# ---------------------------------------------------------------------------
# Conv / pool building blocks (thin XLA glue + fused Pallas compute)
# ---------------------------------------------------------------------------
def _im2col(xp, k, stride, oh, ow):
    b, _, _, cin = xp.shape
    cols = []
    for i in range(k):
        for j in range(k):
            cols.append(xp[:, i:i + stride * (oh - 1) + 1:stride,
                           j:j + stride * (ow - 1) + 1:stride, :])
    kk = k * k * cin
    pad_k = (-kk) % _K_ALIGN
    if pad_k:
        cols.append(jnp.zeros((b, oh, ow, pad_k), xp.dtype))
    patches = jnp.concatenate(cols, axis=-1)
    return patches.reshape(b * oh * ow, kk + pad_k)


def conv_bn(x, p, stride, padding, relu, residual=None):
    """k x k conv + BN (+ residual) (+ ReLU), all fused into one Pallas matmul.
    x: (B, H, W, Cin) bf16 NHWC -> (B, oh, ow, Cout) bf16."""
    b, h, w_, cin = x.shape
    k = p["k"]
    if k == 1:
        assert padding == 0
        if stride > 1:
            x = x[:, ::stride, ::stride, :]
        oh, ow = x.shape[1], x.shape[2]
        a = x.reshape(b * oh * ow, cin)
    else:
        # TODO(synk): k x k convs still materialize a bf16 im2col patch tensor in
        # HBM (read once by the matmul); a halo/window direct-conv kernel would
        # remove this remaining traffic.
        xp = jnp.pad(x, ((0, 0), (padding, padding), (padding, padding), (0, 0)))
        hp, wp = h + 2 * padding, w_ + 2 * padding
        oh = (hp - k) // stride + 1
        ow = (wp - k) // stride + 1
        a = _im2col(xp, k, stride, oh, ow)
    res2 = None
    if residual is not None:
        res2 = residual.reshape(b * oh * ow, residual.shape[-1])
    y = fused_matmul(a, p["wmat"], scale=p["scale"], shift=p["shift"],
                     residual=res2, relu=relu, out_dtype=jnp.bfloat16)
    return y.reshape(b, oh, ow, p["cout"])


def maxpool_3x3_s2_p1(x):
    b, h, w_, c = x.shape
    xp = jnp.pad(x, ((0, 0), (1, 1), (1, 1), (0, 0)), constant_values=-jnp.inf)
    oh = (h + 2 - 3) // 2 + 1
    ow = (w_ + 2 - 3) // 2 + 1
    # TODO(synk): the 9-tap window stack is still materialized by XLA (in bf16);
    # a windowed Pallas kernel over the padded rows would read the input once.
    cols = [xp[:, i:i + 2 * (oh - 1) + 1:2, j:j + 2 * (ow - 1) + 1:2, :]
            for i in range(3) for j in range(3)]
    patches = jnp.stack(cols, axis=3).reshape(b * oh * ow, 9, c)
    y = reduce_mid(patches, op="max", out_dtype=x.dtype)
    return y.reshape(b, oh, ow, c)


def adaptive_avg_pool(x, out_size):
    b, h, w_, c = x.shape
    # TODO(synk): non-divisible adaptive bins (variable window sizes) not
    # implemented; when H, W are divisible by out_size this matches
    # nn.AdaptiveAvgPool2d exactly.
    assert h % out_size == 0 and w_ % out_size == 0
    kh, kw = h // out_size, w_ // out_size
    p = x.reshape(b, out_size, kh, out_size, kw, c)
    p = jnp.transpose(p, (0, 1, 3, 2, 4, 5)).reshape(
        b * out_size * out_size, kh * kw, c)
    y = reduce_mid(p, op="mean", out_dtype=jnp.bfloat16)
    return y.reshape(b, out_size, out_size, c)


# ---------------------------------------------------------------------------
# Deterministic parameter construction (synthetic, resnet50-shaped).
# Weights are stored in their matmul-ready layout: (kh*kw*Cin, Cout) bf16,
# folded BN scale/shift as (1, Cout) f32.
# ---------------------------------------------------------------------------
def _conv_bn_params(key, cin, cout, k):
    kw_, kg, kb, km, kv = jax.random.split(key, 5)
    w = jax.random.normal(kw_, (cout, cin, k, k), jnp.float32) / jnp.sqrt(
        jnp.float32(cin * k * k))
    gamma = jax.random.uniform(kg, (cout,), jnp.float32, 0.5, 1.5)
    beta = jax.random.uniform(kb, (cout,), jnp.float32, -0.1, 0.1)
    rmean = jax.random.uniform(km, (cout,), jnp.float32, -0.1, 0.1)
    rvar = jax.random.uniform(kv, (cout,), jnp.float32, 0.5, 1.5)
    scale = gamma / jnp.sqrt(rvar + 1e-5)
    shift = beta - rmean * scale
    kk = cin * k * k
    wmat = jnp.transpose(w, (2, 3, 1, 0)).reshape(kk, cout)   # (kh*kw*Cin, Cout)
    kkp = _round_up(kk, _K_ALIGN)
    if kkp != kk:
        wmat = jnp.pad(wmat, ((0, kkp - kk), (0, 0)))
    return {"wmat": wmat.astype(jnp.bfloat16),
            "scale": scale.reshape(1, cout),
            "shift": shift.reshape(1, cout),
            "k": k, "cout": cout}


def init_params(key, encoded_image_size, embed_dim):
    keys = list(jax.random.split(key, 256))
    it = iter(keys)
    params = {"conv1": _conv_bn_params(next(it), 3, 64, 7)}
    layers = []
    inplanes = 64
    cfg = [(64, 3), (128, 4), (256, 6), (512, 3)]   # resnet50: 3,4,6,3 bottlenecks
    for li, (planes, nblocks) in enumerate(cfg):
        stride = 1 if li == 0 else 2
        blocks = []
        for bidx in range(nblocks):
            s = stride if bidx == 0 else 1
            blk = {
                "c1": _conv_bn_params(next(it), inplanes, planes, 1),
                "c2": _conv_bn_params(next(it), planes, planes, 3),
                "c3": _conv_bn_params(next(it), planes, planes * 4, 1),
                "stride": s,
            }
            if bidx == 0 and (s != 1 or inplanes != planes * 4):
                blk["down"] = _conv_bn_params(next(it), inplanes, planes * 4, 1)
            blocks.append(blk)
            inplanes = planes * 4
        layers.append(blocks)
    params["layers"] = layers

    k_w, k_b = jax.random.split(next(it))
    # init_weights(): to_embedding.weight ~ U(-0.1, 0.1); bias keeps default init.
    emb_w = jax.random.uniform(k_w, (embed_dim, 2048), jnp.float32, -0.1, 0.1)
    bound = 1.0 / jnp.sqrt(2048.0)
    emb_b = jax.random.uniform(k_b, (embed_dim,), jnp.float32, -bound, bound)
    params["emb_w"] = jnp.transpose(emb_w).astype(jnp.bfloat16)   # (2048, E)
    params["emb_b"] = emb_b.reshape(1, embed_dim)                 # fused as bias
    params["enc_image_size"] = encoded_image_size
    return params


# ---------------------------------------------------------------------------
# Forward pass (matches DinoResEncoder.forward)
# ---------------------------------------------------------------------------
def _bottleneck(x, blk):
    s = blk["stride"]
    if "down" in blk:
        identity = conv_bn(x, blk["down"], stride=s, padding=0, relu=False)
    else:
        identity = x
    y = conv_bn(x, blk["c1"], stride=1, padding=0, relu=True)
    y = conv_bn(y, blk["c2"], stride=s, padding=1, relu=True)
    # conv3 + BN3 + residual add + ReLU fused into a single matmul epilogue.
    y = conv_bn(y, blk["c3"], stride=1, padding=0, relu=True, residual=identity)
    return y


def dino_res_encoder_forward(images_nchw, params):
    """images: (B, 3, H, W) float32 (NCHW, like the PyTorch module).
    Returns (out, gx): out (B, es*es, embed_dim) f32, gx (B, embed_dim) f32."""
    x = jnp.transpose(images_nchw.astype(jnp.float32), (0, 2, 3, 1))
    x = x.astype(jnp.bfloat16)                                   # NHWC bf16

    # stem: conv7x7/2 + BN + ReLU (fused), then maxpool 3x3/2
    x = conv_bn(x, params["conv1"], stride=2, padding=3, relu=True)
    x = maxpool_3x3_s2_p1(x)

    # layer1..layer4
    for blocks in params["layers"]:
        for blk in blocks:
            x = _bottleneck(x, blk)

    # adaptive average pool to (es, es)
    es = params["enc_image_size"]
    x = adaptive_avg_pool(x, es)                                 # (B, es, es, 2048)

    # permute(0,2,3,1) + flatten is already NHWC here -> (B, es*es, 2048)
    b = x.shape[0]
    c = x.shape[-1]
    flat = x.reshape(b * es * es, c)

    # to_embedding: x @ W.T + b, bias fused into the matmul epilogue.
    y = fused_matmul(flat, params["emb_w"], shift=params["emb_b"],
                     relu=False, out_dtype=jnp.float32)
    e = params["emb_b"].shape[-1]
    out = y.reshape(b, es * es, e)

    gx = reduce_mid(out, op="mean", out_dtype=jnp.float32)       # mean over seq dim
    return out, gx


# ---------------------------------------------------------------------------
if __name__ == "__main__":
    key = jax.random.PRNGKey(0)
    k_img, k_par = jax.random.split(key)

    # Small but architecture-consistent shapes:
    # 64x64 input -> resnet50 feature map 2x2x2048, encoded_image_size=2, embed_dim=512
    B, H = 2, 64
    encoded_image_size = 2
    embed_dim = 512

    images = jax.random.normal(k_img, (B, 3, H, H), jnp.float32)
    params = init_params(k_par, encoded_image_size, embed_dim)

    out, gx = dino_res_encoder_forward(images, params)
    out = jax.block_until_ready(out)
    gx = jax.block_until_ready(gx)

    assert out.shape == (B, encoded_image_size * encoded_image_size, embed_dim)
    assert gx.shape == (B, embed_dim)
    assert bool(jnp.all(jnp.isfinite(out))) and bool(jnp.all(jnp.isfinite(gx)))
    print("KERNEL_OK")
</pallas_src>

<mosaic_0001>
module attributes {stable_mosaic.version = 11 : i64} {
  func.func @_fused_matmul_kernel(%arg0: i32, %arg1: i32, %arg2: i32, %arg3: memref<512x160xbf16, #tpu.memory_space<vmem>>, %arg4: memref<160x64xbf16, #tpu.memory_space<vmem>>, %arg5: memref<1x64xf32, #tpu.memory_space<vmem>>, %arg6: memref<1x64xf32, #tpu.memory_space<vmem>>, %arg7: memref<512x64xbf16, #tpu.memory_space<vmem>>, %arg8: memref<512x64xf32, #tpu.memory_space<vmem>>) attributes {dimension_semantics = [#tpu.dimension_semantics<parallel>, #tpu.dimension_semantics<parallel>, #tpu.dimension_semantics<arbitrary>], iteration_bounds = array<i64: 4, 1, 1>, scalar_prefetch = 0 : i64, scratch_operands = 1 : i64, tpu.core_type = #tpu.core_type<tc>, window_params = [{transform_indices = @transform_0, window_bounds = array<i64: 512, 160>}, {transform_indices = @transform_1, window_bounds = array<i64: 160, 64>}, {transform_indices = @transform_2, window_bounds = array<i64: 1, 64>}, {transform_indices = @transform_3, window_bounds = array<i64: 1, 64>}, {transform_indices = @transform_4, window_bounds = array<i64: 512, 64>}]} {
    %c0_i32 = arith.constant 0 : i32
    %0 = arith.cmpi eq, %arg2, %c0_i32 : i32
    %1 = arith.extui %0 : i1 to i32
    %c0_i32_0 = arith.constant 0 : i32
    %2 = arith.cmpi ne, %1, %c0_i32_0 : i32
    scf.if %2 {
      %cst_10 = arith.constant 0.000000e+00 : f32
      %12 = vector.broadcast %cst_10 : f32 to vector<512x64xf32>
      %c0_11 = arith.constant 0 : index
      %c0_12 = arith.constant 0 : index
      %13 = vector.load %arg8[%c0_11, %c0_12] : memref<512x64xf32, #tpu.memory_space<vmem>>, vector<512x64xf32>
      tpu.vector_store %arg8[%c0_11, %c0_12], %12 {strides = array<i32>} : memref<512x64xf32, #tpu.memory_space<vmem>>, vector<512x64xf32>,
    } else {
    }
    %c0 = arith.constant 0 : index
    %c0_1 = arith.constant 0 : index
    %3 = vector.load %arg8[%c0, %c0_1] : memref<512x64xf32, #tpu.memory_space<vmem>>, vector<512x64xf32>
    %c0_2 = arith.constant 0 : index
    %c0_3 = arith.constant 0 : index
    %4 = vector.load %arg3[%c0_2, %c0_3] : memref<512x160xbf16, #tpu.memory_space<vmem>>, vector<512x160xbf16>
    %c0_4 = arith.constant 0 : index
    %c0_5 = arith.constant 0 : index
    %5 = vector.load %arg4[%c0_4, %c0_5] : memref<160x64xbf16, #tpu.memory_space<vmem>>, vector<160x64xbf16>
    %cst = arith.constant dense<0.000000e+00> : vector<512x64xf32>
    %6 = tpu.matmul %4, %5, %cst {dimension_numbers = #tpu.dot_dimension_numbers<[1], [0], [0], [1], [0, 0, 1, 1], [], []>} : vector<512x160xbf16>, vector<160x64xbf16>, vector<512x64xf32> -> vector<512x64xf32>
    %7 = arith.addf %3, %6 : vector<512x64xf32>
    %c0_6 = arith.constant 0 : index
    %c0_7 = arith.constant 0 : index
    %8 = vector.load %arg8[%c0_6, %c0_7] : memref<512x64xf32, #tpu.memory_space<vmem>>, vector<512x64xf32>
    tpu.vector_store %arg8[%c0_6, %c0_7], %7 {strides = array<i32>} : memref<512x64xf32, #tpu.memory_space<vmem>>, vector<512x64xf32>,
    %c0_i32_8 = arith.constant 0 : i32
    %9 = arith.cmpi eq, %arg2, %c0_i32_8 : i32
    %10 = arith.extui %9 : i1 to i32
    %c0_i32_9 = arith.constant 0 : i32
    %11 = arith.cmpi ne, %10, %c0_i32_9 : i32
    scf.if %11 {
      %c0_10 = arith.constant 0 : index
      %c0_11 = arith.constant 0 : index
      %12 = vector.load %arg8[%c0_10, %c0_11] : memref<512x64xf32, #tpu.memory_space<vmem>>, vector<512x64xf32>
      %c0_12 = arith.constant 0 : index
      %c0_13 = arith.constant 0 : index
      %13 = vector.load %arg5[%c0_12, %c0_13] : memref<1x64xf32, #tpu.memory_space<vmem>>, vector<1x64xf32>
      %14 = vector.broadcast %13 : vector<1x64xf32> to vector<512x64xf32>
      %15 = arith.mulf %12, %14 : vector<512x64xf32>
      %c0_14 = arith.constant 0 : index
      %c0_15 = arith.constant 0 : index
      %16 = vector.load %arg6[%c0_14, %c0_15] : memref<1x64xf32, #tpu.memory_space<vmem>>, vector<1x64xf32>
      %17 = vector.broadcast %16 : vector<1x64xf32> to vector<512x64xf32>
      %18 = arith.addf %15, %17 : vector<512x64xf32>
      %cst_16 = arith.constant 0.000000e+00 : f32
      %19 = vector.broadcast %cst_16 : f32 to vector<512x64xf32>
      %20 = arith.maximumf %18, %19 : vector<512x64xf32>
      %21 = arith.truncf %20 : vector<512x64xf32> to vector<512x64xbf16>
      %c0_17 = arith.constant 0 : index
      %c0_18 = arith.constant 0 : index
      %22 = vector.load %arg7[%c0_17, %c0_18] : memref<512x64xbf16, #tpu.memory_space<vmem>>, vector<512x64xbf16>
      tpu.vector_store %arg7[%c0_17, %c0_18], %21 {strides = array<i32>} : memref<512x64xbf16, #tpu.memory_space<vmem>>, vector<512x64xbf16>,
    } else {
    }
    return
  }
  func.func @transform_0(%arg0: i32, %arg1: i32, %arg2: i32) -> (i32, i32) {
    %c0_i32 = arith.constant 0 : i32
    return %arg0, %arg2 : i32, i32
  }
  func.func @transform_1(%arg0: i32, %arg1: i32, %arg2: i32) -> (i32, i32) {
    %c0_i32 = arith.constant 0 : i32
    return %arg2, %arg1 : i32, i32
  }
  func.func @transform_2(%arg0: i32, %arg1: i32, %arg2: i32) -> (i32, i32) {
    %c0_i32 = arith.constant 0 : i32
    %c0_i32_0 = arith.constant 0 : i32
    return %c0_i32, %arg1 : i32, i32
  }
  func.func @transform_3(%arg0: i32, %arg1: i32, %arg2: i32) -> (i32, i32) {
    %c0_i32 = arith.constant 0 : i32
    %c0_i32_0 = arith.constant 0 : i32
    return %c0_i32, %arg1 : i32, i32
  }
  func.func @transform_4(%arg0: i32, %arg1: i32, %arg2: i32) -> (i32, i32) {
    %c0_i32 = arith.constant 0 : i32
    return %arg0, %arg1 : i32, i32
  }
}

</mosaic_0001>

<llo_original>
// kernel: tpu_custom_call.1
$region0: #{tpu_custom_call.1}
  #allocation0 [shape = 'u32[]', space=smem, size = 0x4, offset = 0x4, fixed_abs, tag = 'smem constant byte address 0x4 - core index']
  #allocation1 [shape = 'u32[144,128]{1,0:T(1,128)}', space=vmem, size = 0x12000, scoped, tag = 'internal scratch']
  #allocation2 [shape = 'f32[512,64]{1,0:T(8,128)}', space=vmem, size = 0x40000, scoped, tag = 'scratch operand']
  %s0 = inlined_call_operand.vmem [shape: bf16[2048,160], index: 0, kind: input, shape index: {}]
  %s1 = inlined_call_operand.vmem [shape: bf16[160,64], index: 1, kind: input, shape index: {}]
  %s2 = inlined_call_operand.vmem [shape: f32[1,64], index: 2, kind: input, shape index: {}]
  %s3 = inlined_call_operand.vmem [shape: f32[1,64], index: 3, kind: input, shape index: {}]
  %s4 = inlined_call_operand.vmem [shape: bf16[2048,64], index: 4, kind: output, shape index: {}]
  %s5 = sld [smem:[#allocation0]]
  $region57: #{tpu_custom_call.1} parent=0
    _
  %s7 = ssub.s32 1, %s5
  %s8 = scalar_select 0, %s7, %s5
  loop: start=0, step=1, limit=6
  $region2: #{tpu_custom_call.1} parent=0 // loop_pre_header
    _
  $region3: #{tpu_custom_call.1} parent=0 // loop_header
    %s10 = sphi 0, %s14
    %p11 = scmp.ge.s32.totalorder %s10, 6
    %s17 = sphi 0, %s36
    %s18 = sphi 0, %s32
    %s19 = sphi 0, %s28
    %s20 = sphi 0, %s17
    %s21 = sphi 0, %s18
    %s22 = sphi 0, %s19
    %s23 = sphi 0, %s20
    %s24 = sphi 0, %s21
    %s25 = sphi 0, %s22
    %s41 = sphi 0, %s43
    %s44 = sphi 0, %s41
    %s45 = sphi 0, %s44
    %s61 = sphi 0, %s45
    %s69 = sphi 0, %s71
    %s72 = sphi 0, %s69
    %s73 = sphi 0, %s72
    %s89 = sphi 0, %s73
    %s95 = sphi 0, %s97
    %s98 = sphi 0, %s95
    %s99 = sphi 0, %s98
    %s115 = sphi 0, %s99
    %s121 = sphi 0, %s123
    %s124 = sphi 0, %s121
    %s125 = sphi 0, %s124
    %s141 = sphi 0, %s125
    %s149 = sphi 0, %s151
    %s152 = sphi 0, %s149
    %s153 = sphi 0, %s152
    %s169 = sphi 0, %s153
  $region4: #{tpu_custom_call.1} parent=0 // loop_header_branch
    %13 = sbr.rel (%p11) target = $region8
  $region5: #{tpu_custom_call.1} parent=0 // loop_body
    %s15 = ssub.s32 %s10, 1
    %s16 = ssub.s32 %s10, 2
    %s26 = sadd.s32 1, %s19
    %p27 = scmp.ge.s32.totalorder %s26, 1
    %s28 = scalar_select %p27, 0, %s26
    %s29 = sadd.s32 1, %s18
    %s30 = scalar_select %p27, %s29, %s18
    %p31 = scmp.ge.s32.totalorder %s30, 1
    %s32 = scalar_select %p31, 0, %s30
    %s33 = sadd.s32 1, %s17
    %s34 = scalar_select %p31, %s33, %s17
    %p35 = scmp.ge.s32.totalorder %s34, 4
    %s36 = scalar_select %p35, 0, %s34
    %s37 = ssub.s32 %s17, %s36
    %s38 = ssub.s32 %s19, %s28
    %s39 = sor.u32 %s37, %s38
    %p40 = scmp.eq.s32.totalorder %s39, 0
    %s42 = sadd.s32 %s41, 1
    %s43 = scalar_select %p40, %s41, %s42
    %p46 = pneg %p40
    %p47 = scmp.eq.s32.totalorder %s10, 3
    %p48 = por %p46, %p47
    %p49 = scmp.ne.s32.totalorder %s41, %s44
    %p50 = scmp.eq.s32.totalorder %s10, 0
    %p51 = por %p49, %p50
    %p52 = scmp.ne.s32.totalorder %s41, %s44
    %p53 = scmp.eq.s32.totalorder %s15, 3
    %p54 = por %p52, %p53
    %p55 = scmp.ne.s32.totalorder %s44, %s45
    %p56 = scmp.eq.s32.totalorder %s15, 0
    %p57 = por %p55, %p56
    %p58 = scmp.ne.s32.totalorder %s44, %s45
    %p59 = scmp.eq.s32.totalorder %s16, 3
    %p60 = por %p58, %p59
    %p62 = scmp.ne.s32.totalorder %s45, %s61
    %p63 = scmp.eq.s32.totalorder %s16, 0
    %p64 = por %p62, %p63
    %s65 = ssub.s32 %s19, %s28
    %s66 = ssub.s32 %s18, %s32
    %s67 = sor.u32 %s65, %s66
    %p68 = scmp.eq.s32.totalorder %s67, 0
    %s70 = sadd.s32 %s69, 1
    %s71 = scalar_select %p68, %s69, %s70
    %p74 = pneg %p68
    %p75 = scmp.eq.s32.totalorder %s10, 3
    %p76 = por %p74, %p75
    %p77 = scmp.ne.s32.totalorder %s69, %s72
    %p78 = scmp.eq.s32.totalorder %s10, 0
    %p79 = por %p77, %p78
    %p80 = scmp.ne.s32.totalorder %s69, %s72
    %p81 = scmp.eq.s32.totalorder %s15, 3
    %p82 = por %p80, %p81
    %p83 = scmp.ne.s32.totalorder %s72, %s73
    %p84 = scmp.eq.s32.totalorder %s15, 0
    %p85 = por %p83, %p84
    %p86 = scmp.ne.s32.totalorder %s72, %s73
    %p87 = scmp.eq.s32.totalorder %s16, 3
    %p88 = por %p86, %p87
    %p90 = scmp.ne.s32.totalorder %s73, %s89
    %p91 = scmp.eq.s32.totalorder %s16, 0
    %p92 = por %p90, %p91
    %s93 = ssub.s32 %s18, %s32
    %p94 = scmp.eq.s32.totalorder %s93, 0
    %s96 = sadd.s32 %s95, 1
    %s97 = scalar_select %p94, %s95, %s96
    %p100 = pneg %p94
    %p101 = scmp.eq.s32.totalorder %s10, 3
    %p102 = por %p100, %p101
    %p103 = scmp.ne.s32.totalorder %s95, %s98
    %p104 = scmp.eq.s32.totalorder %s10, 0
    %p105 = por %p103, %p104
    %p106 = scmp.ne.s32.totalorder %s95, %s98
    %p107 = scmp.eq.s32.totalorder %s15, 3
    %p108 = por %p106, %p107
    %p109 = scmp.ne.s32.totalorder %s98, %s99
    %p110 = scmp.eq.s32.totalorder %s15, 0
    %p111 = por %p109, %p110
    %p112 = scmp.ne.s32.totalorder %s98, %s99
    %p113 = scmp.eq.s32.totalorder %s16, 3
    %p114 = por %p112, %p113
    %p116 = scmp.ne.s32.totalorder %s99, %s115
    %p117 = scmp.eq.s32.totalorder %s16, 0
    %p118 = por %p116, %p117
    %s119 = ssub.s32 %s18, %s32
    %p120 = scmp.eq.s32.totalorder %s119, 0
    %s122 = sadd.s32 %s121, 1
    %s123 = scalar_select %p120, %s121, %s122
    %p126 = pneg %p120
    %p127 = scmp.eq.s32.totalorder %s10, 3
    %p128 = por %p126, %p127
    %p129 = scmp.ne.s32.totalorder %s121, %s124
    %p130 = scmp.eq.s32.totalorder %s10, 0
    %p131 = por %p129, %p130
    %p132 = scmp.ne.s32.totalorder %s121, %s124
    %p133 = scmp.eq.s32.totalorder %s15, 3
    %p134 = por %p132, %p133
    %p135 = scmp.ne.s32.totalorder %s124, %s125
    %p136 = scmp.eq.s32.totalorder %s15, 0
    %p137 = por %p135, %p136
    %p138 = scmp.ne.s32.totalorder %s124, %s125
    %p139 = scmp.eq.s32.totalorder %s16, 3
    %p140 = por %p138, %p139
    %p142 = scmp.ne.s32.totalorder %s125, %s141
    %p143 = scmp.eq.s32.totalorder %s16, 0
    %p144 = por %p142, %p143
    %s145 = ssub.s32 %s17, %s36
    %s146 = ssub.s32 %s18, %s32
    %s147 = sor.u32 %s145, %s146
    %p148 = scmp.eq.s32.totalorder %s147, 0
    %s150 = sadd.s32 %s149, 1
    %s151 = scalar_select %p148, %s149, %s150
    %p154 = pneg %p148
    %p155 = scmp.eq.s32.totalorder %s10, 3
    %p156 = por %p154, %p155
    %p157 = scmp.ne.s32.totalorder %s149, %s152
    %p158 = scmp.eq.s32.totalorder %s10, 0
    %p159 = por %p157, %p158
    %p160 = scmp.ne.s32.totalorder %s149, %s152
    %p161 = scmp.eq.s32.totalorder %s15, 3
    %p162 = por %p160, %p161
    %p163 = scmp.ne.s32.totalorder %s152, %s153
    %p164 = scmp.eq.s32.totalorder %s15, 0
    %p165 = por %p163, %p164
    %p166 = scmp.ne.s32.totalorder %s152, %s153
    %p167 = scmp.eq.s32.totalorder %s16, 3
    %p168 = por %p166, %p167
    %p170 = scmp.ne.s32.totalorder %s153, %s169
    %p171 = scmp.eq.s32.totalorder %s16, 0
    %p172 = por %p170, %p171
    %p173 = scmp.le.s32.totalorder 1, %s10
    %p174 = scmp.lt.s32.totalorder %s10, 5
    %p175 = pnand %p173, %p174
    %p176 = pneg %p175
    // Predicated region
    $region9: #{tpu_custom_call.1} parent=5 // pred_check
      _
    $region10: #{tpu_custom_call.1} parent=5 // pred_check_branch
      %178 = sbr.rel (%p175) target = $region12
    $region11: #{tpu_custom_call.1} parent=5 // pred_region
      %s179 = ssub.s32 %s10, 1
      // Predicated region
      $region13: #{tpu_custom_call.1} parent=11 // pred_check
        %p180 = pneg %p85
      $region14: #{tpu_custom_call.1} parent=11 // pred_check_branch
        %182 = sbr.rel (%p180) target = $region16
      $region15: #{tpu_custom_call.1} parent=11 // pred_region
        %s183 = smul.u32 20, %s22
        %p184 = scmp.lt.s32.totalorder %s183, 19
        %s185 = scalar_select %p184, %s183, 19
        %p186 = scmp.lt.s32.totalorder %s21, 0
        %s187 = scalar_select %p186, %s21, 0
        %s188 = sadd.s32 %s187, %s185
        %s189 = smul.addr %s188, 4
        %s190 = scalar_lea.vmem %s1, %s189
        %s191 = smul.u32 20, %s22
      $region16: #{tpu_custom_call.1} parent=11 // pred_fallthru
        _
      // Predicated region
      $region17: #{tpu_custom_call.1} parent=11 // pred_check
        %p192 = pneg %p111
      $region18: #{tpu_custom_call.1} parent=11 // pred_check_branch
        %194 = sbr.rel (%p192) target = $region20
      $region19: #{tpu_custom_call.1} parent=11 // pred_region
        %p195 = scmp.lt.s32.totalorder %s21, 0
        %s196 = scalar_select %p195, %s21, 0
        %s197 = scalar_lea.vmem %s2, %s196
      $region20: #{tpu_custom_call.1} parent=11 // pred_fallthru
        _
      // Predicated region
      $region21: #{tpu_custom_call.1} parent=11 // pred_check
        %p198 = pneg %p137
      $region22: #{tpu_custom_call.1} parent=11 // pred_check_branch
        %200 = sbr.rel (%p198) target = $region24
      $region23: #{tpu_custom_call.1} parent=11 // pred_region
        %p201 = scmp.lt.s32.totalorder %s21, 0
        %s202 = scalar_select %p201, %s21, 0
        %s203 = scalar_lea.vmem %s3, %s202
      $region24: #{tpu_custom_call.1} parent=11 // pred_fallthru
        _
    $region12: #{tpu_custom_call.1} parent=5 // pred_fallthru
      _
    %p204 = scmp.lt.s32.totalorder %s10, 4
    // Predicated region
    $region25: #{tpu_custom_call.1} parent=5 // pred_check
      %p205 = pneg %p204
    $region26: #{tpu_custom_call.1} parent=5 // pred_check_branch
      %207 = sbr.rel (%p205) target = $region28
    $region27: #{tpu_custom_call.1} parent=5 // pred_region
      // Predicated region
      $region29: #{tpu_custom_call.1} parent=27 // pred_check
        %p208 = pneg %p51
      $region30: #{tpu_custom_call.1} parent=27 // pred_check_branch
        %210 = sbr.rel (%p208) target = $region32
      $region31: #{tpu_custom_call.1} parent=27 // pred_region
        %s211 = smul.u32 64, %s17
        %s212 = smul.u32 2, %s19
        %p213 = scmp.lt.s32.totalorder %s211, 255
        %s214 = scalar_select %p213, %s211, 255
        %p215 = scmp.lt.s32.totalorder %s212, 1
        %s216 = scalar_select %p215, %s212, 1
        %s217 = smul.addr %s214, 2
        %s218 = sadd.s32 %s216, %s217
        %s219 = smul.addr %s218, 4
        %s220 = scalar_lea.vmem %s0, %s219
        %s221 = smul.u32 64, %s17
        %s222 = smul.u32 2, %s19
      $region32: #{tpu_custom_call.1} parent=27 // pred_fallthru
        _
    $region28: #{tpu_custom_call.1} parent=5 // pred_fallthru
      _
    %p223 = scmp.le.s32.totalorder 1, %s10
    %p224 = scmp.lt.s32.totalorder %s10, 5
    %p225 = pnand %p223, %p224
    %p226 = pneg %p225
    // Predicated region
    $region33: #{tpu_custom_call.1} parent=5 // pred_check
      _
    $region34: #{tpu_custom_call.1} parent=5 // pred_check_branch
      %228 = sbr.rel (%p225) target = $region36
    $region35: #{tpu_custom_call.1} parent=5 // pred_region
      %s229 = ssub.s32 %s10, 1
      %s230 = smul.u32 64, %s20
      %s231 = smul.u32 2, %s22
      %p232 = scmp.lt.s32.totalorder %s230, 255
      %s233 = scalar_select %p232, %s230, 255
      %p234 = scmp.lt.s32.totalorder %s231, 1
      %s235 = scalar_select %p234, %s231, 1
      %s236 = smul.addr %s233, 2
      %s237 = sadd.s32 %s235, %s236
      %s238 = smul.addr %s237, 4
      %s239 = scalar_lea.vmem %s0, %s238
      %p240 = pneg %p57
      %p241 = pneg %p54
      %s242 = smul.u32 20, %s22
      %p243 = scmp.lt.s32.totalorder %s242, 19
      %s244 = scalar_select %p243, %s242, 19
      %p245 = scmp.lt.s32.totalorder %s21, 0
      %s246 = scalar_select %p245, %s21, 0
      %s247 = sadd.s32 %s246, %s244
      %s248 = smul.addr %s247, 4
      %s249 = scalar_lea.vmem %s1, %s248
      %p250 = pneg %p85
      %p251 = pneg %p82
      %p252 = scmp.lt.s32.totalorder %s21, 0
      %s253 = scalar_select %p252, %s21, 0
      %s254 = scalar_lea.vmem %s2, %s253
      %p255 = pneg %p111
      %p256 = pneg %p108
      %p257 = scmp.lt.s32.totalorder %s21, 0
      %s258 = scalar_select %p257, %s21, 0
      %s259 = scalar_lea.vmem %s3, %s258
      %p260 = pneg %p137
      %p261 = pneg %p134
      %p262 = pneg %p165
      %p263 = pneg %p162
      %s264 = smul.u32 64, %s20
      %p265 = scmp.lt.s32.totalorder %s264, 255
      %s266 = scalar_select %p265, %s264, 255
      %p267 = scmp.lt.s32.totalorder %s21, 0
      %s268 = scalar_select %p267, %s21, 0
      %s269 = sadd.s32 %s268, %s266
      %s270 = smul.addr %s269, 4
      %s271 = scalar_lea.vmem %s4, %s270
      %s272 = smul.u32 64, %s20
      %s273 = smul.u32 2, %s22
      %p274 = scmp.lt.s32.totalorder %s272, 255
      %s275 = scalar_select %p274, %s272, 255
      %p276 = scmp.lt.s32.totalorder %s273, 1
      %s277 = scalar_select %p276, %s273, 1
      %s278 = smul.addr %s275, 2
      %s279 = sadd.s32 %s277, %s278
      %s280 = smul.addr %s279, 4
      %s281 = scalar_lea.vmem %s0, %s280
      %s282 = smul.u32 64, %s20
      %s283 = smul.u32 2, %s22
      %s284 = smul.u32 20, %s22
      %p285 = scmp.lt.s32.totalorder %s284, 19
      %s286 = scalar_select %p285, %s284, 19
      %p287 = scmp.lt.s32.totalorder %s21, 0
      %s288 = scalar_select %p287, %s21, 0
      %s289 = sadd.s32 %s288, %s286
      %s290 = smul.addr %s289, 4
      %s291 = scalar_lea.vmem %s1, %s290
      %s292 = smul.u32 20, %s22
      %p293 = scmp.lt.s32.totalorder %s21, 0
      %s294 = scalar_select %p293, %s21, 0
      %s295 = scalar_lea.vmem %s2, %s294
      %p296 = scmp.lt.s32.totalorder %s21, 0
      %s297 = scalar_select %p296, %s21, 0
      %s298 = scalar_lea.vmem %s3, %s297
      %s299 = smul.u32 64, %s20
      %p300 = scmp.lt.s32.totalorder %s299, 255
      %s301 = scalar_select %p300, %s299, 255
      %p302 = scmp.lt.s32.totalorder %s21, 0
      %s303 = scalar_select %p302, %s21, 0
      %s304 = sadd.s32 %s303, %s301
      %s305 = smul.addr %s304, 4
      %s306 = scalar_lea.vmem %s4, %s305
      %s307 = smul.u32 64, %s20
      %p309 = scmp.eq.s32.totalorder %s22, 0
      // Predicated region
      $region37: #{tpu_custom_call.1} parent=35 // pred_check
        %p310 = pneg %p309
      $region38: #{tpu_custom_call.1} parent=35 // pred_check_branch
        %312 = sbr.rel (%p310) target = $region40
      $region39: #{tpu_custom_call.1} parent=35 // pred_region
        %vm313 = vcmask 523264
        %314 = vst.msk [vmem:[#allocation2] sm:$0xff] %vm313, 0.0
        %315 = vst.msk [vmem:[#allocation2 + $0x8] sm:$0xff] %vm313, 0.0
        %316 = vst.msk [vmem:[#allocation2 + $0x10] sm:$0xff] %vm313, 0.0
        %317 = vst.msk [vmem:[#allocation2 + $0x18] sm:$0xff] %vm313, 0.0
        %318 = vst.msk [vmem:[#allocation2 + $0x20] sm:$0xff] %vm313, 0.0
        %319 = vst.msk [vmem:[#allocation2 + $0x28] sm:$0xff] %vm313, 0.0
        %320 = vst.msk [vmem:[#allocation2 + $0x30] sm:$0xff] %vm313, 0.0
        %321 = vst.msk [vmem:[#allocation2 + $0x38] sm:$0xff] %vm313, 0.0
        %322 = vst.msk [vmem:[#allocation2 + $0x40] sm:$0xff] %vm313, 0.0
        %323 = vst.msk [vmem:[#allocation2 + $0x48] sm:$0xff] %vm313, 0.0
        %324 = vst.msk [vmem:[#allocation2 + $0x50] sm:$0xff] %vm313, 0.0
        %325 = vst.msk [vmem:[#allocation2 + $0x58] sm:$0xff] %vm313, 0.0
        %326 = vst.msk [vmem:[#allocation2 + $0x60] sm:$0xff] %vm313, 0.0
        %327 = vst.msk [vmem:[#allocation2 + $0x68] sm:$0xff] %vm313, 0.0
        %328 = vst.msk [vmem:[#allocation2 + $0x70] sm:$0xff] %vm313, 0.0
        %329 = vst.msk [vmem:[#allocation2 + $0x78] sm:$0xff] %vm313, 0.0
        %330 = vst.msk [vmem:[#allocation2 + $0x80] sm:$0xff] %vm313, 0.0
        %331 = vst.msk [vmem:[#allocation2 + $0x88] sm:$0xff] %vm313, 0.0
        %332 = vst.msk [vmem:[#allocation2 + $0x90] sm:$0xff] %vm313, 0.0
        %333 = vst.msk [vmem:[#allocation2 + $0x98] sm:$0xff] %vm313, 0.0
        %334 = vst.msk [vmem:[#allocation2 + $0xa0] sm:$0xff] %vm313, 0.0
        %335 = vst.msk [vmem:[#allocation2 + $0xa8] sm:$0xff] %vm313, 0.0
        %336 = vst.msk [vmem:[#allocation2 + $0xb0] sm:$0xff] %vm313, 0.0
        %337 = vst.msk [vmem:[#allocation2 + $0xb8] sm:$0xff] %vm313, 0.0
        %338 = vst.msk [vmem:[#allocation2 + $0xc0] sm:$0xff] %vm313, 0.0
        %339 = vst.msk [vmem:[#allocation2 + $0xc8] sm:$0xff] %vm313, 0.0
        %340 = vst.msk [vmem:[#allocation2 + $0xd0] sm:$0xff] %vm313, 0.0
        %341 = vst.msk [vmem:[#allocation2 + $0xd8] sm:$0xff] %vm313, 0.0
        %342 = vst.msk [vmem:[#allocation2 + $0xe0] sm:$0xff] %vm313, 0.0
        %343 = vst.msk [vmem:[#allocation2 + $0xe8] sm:$0xff] %vm313, 0.0
        %344 = vst.msk [vmem:[#allocation2 + $0xf0] sm:$0xff] %vm313, 0.0
        %345 = vst.msk [vmem:[#allocation2 + $0xf8] sm:$0xff] %vm313, 0.0
        %346 = vst.msk [vmem:[#allocation2 + $0x100] sm:$0xff] %vm313, 0.0
        %347 = vst.msk [vmem:[#allocation2 + $0x108] sm:$0xff] %vm313, 0.0
        %348 = vst.msk [vmem:[#allocation2 + $0x110] sm:$0xff] %vm313, 0.0
        %349 = vst.msk [vmem:[#allocation2 + $0x118] sm:$0xff] %vm313, 0.0
        %350 = vst.msk [vmem:[#allocation2 + $0x120] sm:$0xff] %vm313, 0.0
        %351 = vst.msk [vmem:[#allocation2 + $0x128] sm:$0xff] %vm313, 0.0
        %352 = vst.msk [vmem:[#allocation2 + $0x130] sm:$0xff] %vm313, 0.0
        %353 = vst.msk [vmem:[#allocation2 + $0x138] sm:$0xff] %vm313, 0.0
        %354 = vst.msk [vmem:[#allocation2 + $0x140] sm:$0xff] %vm313, 0.0
        %355 = vst.msk [vmem:[#allocation2 + $0x148] sm:$0xff] %vm313, 0.0
        %356 = vst.msk [vmem:[#allocation2 + $0x150] sm:$0xff] %vm313, 0.0
        %357 = vst.msk [vmem:[#allocation2 + $0x158] sm:$0xff] %vm313, 0.0
        %358 = vst.msk [vmem:[#allocation2 + $0x160] sm:$0xff] %vm313, 0.0
        %359 = vst.msk [vmem:[#allocation2 + $0x168] sm:$0xff] %vm313, 0.0
        %360 = vst.msk [vmem:[#allocation2 + $0x170] sm:$0xff] %vm313, 0.0
        %361 = vst.msk [vmem:[#allocation2 + $0x178] sm:$0xff] %vm313, 0.0
        %362 = vst.msk [vmem:[#allocation2 + $0x180] sm:$0xff] %vm313, 0.0
        %363 = vst.msk [vmem:[#allocation2 + $0x188] sm:$0xff] %vm313, 0.0
        %364 = vst.msk [vmem:[#allocation2 + $0x190] sm:$0xff] %vm313, 0.0
        %365 = vst.msk [vmem:[#allocation2 + $0x198] sm:$0xff] %vm313, 0.0
        %366 = vst.msk [vmem:[#allocation2 + $0x1a0] sm:$0xff] %vm313, 0.0
        %367 = vst.msk [vmem:[#allocation2 + $0x1a8] sm:$0xff] %vm313, 0.0
        %368 = vst.msk [vmem:[#allocation2 + $0x1b0] sm:$0xff] %vm313, 0.0
        %369 = vst.msk [vmem:[#allocation2 + $0x1b8] sm:$0xff] %vm313, 0.0
        %370 = vst.msk [vmem:[#allocation2 + $0x1c0] sm:$0xff] %vm313, 0.0
        %371 = vst.msk [vmem:[#allocation2 + $0x1c8] sm:$0xff] %vm313, 0.0
        %372 = vst.msk [vmem:[#allocation2 + $0x1d0] sm:$0xff] %vm313, 0.0
        %373 = vst.msk [vmem:[#allocation2 + $0x1d8] sm:$0xff] %vm313, 0.0
        %374 = vst.msk [vmem:[#allocation2 + $0x1e0] sm:$0xff] %vm313, 0.0
        %375 = vst.msk [vmem:[#allocation2 + $0x1e8] sm:$0xff] %vm313, 0.0
        %376 = vst.msk [vmem:[#allocation2 + $0x1f0] sm:$0xff] %vm313, 0.0
        %377 = vst.msk [vmem:[#allocation2 + $0x1f8] sm:$0xff] %vm313, 0.0
      $region40: #{tpu_custom_call.1} parent=35 // pred_fallthru
        _
      %v378 = vld [vmem:[#allocation2] sm:$0xff]
      %v379 = vld [vmem:[#allocation2 + $0x8] sm:$0xff]
      %v380 = vld [vmem:[#allocation2 + $0x10] sm:$0xff]
      %v381 = vld [vmem:[#allocation2 + $0x18] sm:$0xff]
      %v382 = vld [vmem:[#allocation2 + $0x20] sm:$0xff]
      %v383 = vld [vmem:[#allocation2 + $0x28] sm:$0xff]
      %v384 = vld [vmem:[#allocation2 + $0x30] sm:$0xff]
      %v385 = vld [vmem:[#allocation2 + $0x38] sm:$0xff]
      %v386 = vld [vmem:[#allocation2 + $0x40] sm:$0xff]
      %v387 = vld [vmem:[#allocation2 + $0x48] sm:$0xff]
      %v388 = vld [vmem:[#allocation2 + $0x50] sm:$0xff]
      %v389 = vld [vmem:[#allocation2 + $0x58] sm:$0xff]
      %v390 = vld [vmem:[#allocation2 + $0x60] sm:$0xff]
      %v391 = vld [vmem:[#allocation2 + $0x68] sm:$0xff]
      %v392 = vld [vmem:[#allocation2 + $0x70] sm:$0xff]
      %v393 = vld [vmem:[#allocation2 + $0x78] sm:$0xff]
      %v394 = vld [vmem:[#allocation2 + $0x80] sm:$0xff]
      %v395 = vld [vmem:[#allocation2 + $0x88] sm:$0xff]
      %v396 = vld [vmem:[#allocation2 + $0x90] sm:$0xff]
      %v397 = vld [vmem:[#allocation2 + $0x98] sm:$0xff]
      %v398 = vld [vmem:[#allocation2 + $0xa0] sm:$0xff]
      %v399 = vld [vmem:[#allocation2 + $0xa8] sm:$0xff]
      %v400 = vld [vmem:[#allocation2 + $0xb0] sm:$0xff]
      %v401 = vld [vmem:[#allocation2 + $0xb8] sm:$0xff]
      %v402 = vld [vmem:[#allocation2 + $0xc0] sm:$0xff]
      %v403 = vld [vmem:[#allocation2 + $0xc8] sm:$0xff]
      %v404 = vld [vmem:[#allocation2 + $0xd0] sm:$0xff]
      %v405 = vld [vmem:[#allocation2 + $0xd8] sm:$0xff]
      %v406 = vld [vmem:[#allocation2 + $0xe0] sm:$0xff]
      %v407 = vld [vmem:[#allocation2 + $0xe8] sm:$0xff]
      %v408 = vld [vmem:[#allocation2 + $0xf0] sm:$0xff]
      %v409 = vld [vmem:[#allocation2 + $0xf8] sm:$0xff]
      %v410 = vld [vmem:[#allocation2 + $0x100] sm:$0xff]
      %v411 = vld [vmem:[#allocation2 + $0x108] sm:$0xff]
      %v412 = vld [vmem:[#allocation2 + $0x110] sm:$0xff]
      %v413 = vld [vmem:[#allocation2 + $0x118] sm:$0xff]
      %v414 = vld [vmem:[#allocation2 + $0x120] sm:$0xff]
      %v415 = vld [vmem:[#allocation2 + $0x128] sm:$0xff]
      %v416 = vld [vmem:[#allocation2 + $0x130] sm:$0xff]
      %v417 = vld [vmem:[#allocation2 + $0x138] sm:$0xff]
      %v418 = vld [vmem:[#allocation2 + $0x140] sm:$0xff]
      %v419 = vld [vmem:[#allocation2 + $0x148] sm:$0xff]
      %v420 = vld [vmem:[#allocation2 + $0x150] sm:$0xff]
      %v421 = vld [vmem:[#allocation2 + $0x158] sm:$0xff]
      %v422 = vld [vmem:[#allocation2 + $0x160] sm:$0xff]
      %v423 = vld [vmem:[#allocation2 + $0x168] sm:$0xff]
      %v424 = vld [vmem:[#allocation2 + $0x170] sm:$0xff]
      %v425 = vld [vmem:[#allocation2 + $0x178] sm:$0xff]
      %v426 = vld [vmem:[#allocation2 + $0x180] sm:$0xff]
      %v427 = vld [vmem:[#allocation2 + $0x188] sm:$0xff]
      %v428 = vld [vmem:[#allocation2 + $0x190] sm:$0xff]
      %v429 = vld [vmem:[#allocation2 + $0x198] sm:$0xff]
      %v430 = vld [vmem:[#allocation2 + $0x1a0] sm:$0xff]
      %v431 = vld [vmem:[#allocation2 + $0x1a8] sm:$0xff]
      %v432 = vld [vmem:[#allocation2 + $0x1b0] sm:$0xff]
      %v433 = vld [vmem:[#allocation2 + $0x1b8] sm:$0xff]
      %v434 = vld [vmem:[#allocation2 + $0x1c0] sm:$0xff]
      %v435 = vld [vmem:[#allocation2 + $0x1c8] sm:$0xff]
      %v436 = vld [vmem:[#allocation2 + $0x1d0] sm:$0xff]
      %v437 = vld [vmem:[#allocation2 + $0x1d8] sm:$0xff]
      %v438 = vld [vmem:[#allocation2 + $0x1e0] sm:$0xff]
      %v439 = vld [vmem:[#allocation2 + $0x1e8] sm:$0xff]
      %v440 = vld [vmem:[#allocation2 + $0x1f0] sm:$0xff]
      %v441 = vld [vmem:[#allocation2 + $0x1f8] sm:$0xff]
      %v442 = vld [vmem:[%s281] sm:$0xff]
      %v443 = vld [vmem:[%s281 + $0x8] sm:$0xff]
      %v444 = vld [vmem:[%s281 + $0x10] sm:$0xff]
      %v445 = vld [vmem:[%s281 + $0x18] sm:$0xff]
      %v446 = vld [vmem:[%s281 + $0x20] sm:$0xff]
      %v447 = vld [vmem:[%s281 + $0x28] sm:$0xff]
      %v448 = vld [vmem:[%s281 + $0x30] sm:$0xff]
      %v449 = vld [vmem:[%s281 + $0x38] sm:$0xff]
      %v450 = vld [vmem:[%s281 + $0x40] sm:$0xff]
      %v451 = vld [vmem:[%s281 + $0x48] sm:$0xff]
      %v452 = vld [vmem:[%s281 + $0x50] sm:$0xff]
      %v453 = vld [vmem:[%s281 + $0x58] sm:$0xff]
      %v454 = vld [vmem:[%s281 + $0x60] sm:$0xff]
      %v455 = vld [vmem:[%s281 + $0x68] sm:$0xff]
      %v456 = vld [vmem:[%s281 + $0x70] sm:$0xff]
      %v457 = vld [vmem:[%s281 + $0x78] sm:$0xff]
      %v458 = vld [vmem:[%s281 + $0x80] sm:$0xff]
      %v459 = vld [vmem:[%s281 + $0x88] sm:$0xff]
      %v460 = vld [vmem:[%s281 + $0x90] sm:$0xff]
      %v461 = vld [vmem:[%s281 + $0x98] sm:$0xff]
      %v462 = vld [vmem:[%s281 + $0xa0] sm:$0xff]
      %v463 = vld [vmem:[%s281 + $0xa8] sm:$0xff]
      %v464 = vld [vmem:[%s281 + $0xb0] sm:$0xff]
      %v465 = vld [vmem:[%s281 + $0xb8] sm:$0xff]
      %v466 = vld [vmem:[%s281 + $0xc0] sm:$0xff]
      %v467 = vld [vmem:[%s281 + $0xc8] sm:$0xff]
      %v468 = vld [vmem:[%s281 + $0xd0] sm:$0xff]
      %v469 = vld [vmem:[%s281 + $0xd8] sm:$0xff]
      %v470 = vld [vmem:[%s281 + $0xe0] sm:$0xff]
      %v471 = vld [vmem:[%s281 + $0xe8] sm:$0xff]
      %v472 = vld [vmem:[%s281 + $0xf0] sm:$0xff]
      %v473 = vld [vmem:[%s281 + $0xf8] sm:$0xff]
      %v474 = vld [vmem:[%s281 + $0x100] sm:$0xff]
      %v475 = vld [vmem:[%s281 + $0x108] sm:$0xff]
      %v476 = vld [vmem:[%s281 + $0x110] sm:$0xff]
      %v477 = vld [vmem:[%s281 + $0x118] sm:$0xff]
      %v478 = vld [vmem:[%s281 + $0x120] sm:$0xff]
      %v479 = vld [vmem:[%s281 + $0x128] sm:$0xff]
      %v480 = vld [vmem:[%s281 + $0x130] sm:$0xff]
      %v481 = vld [vmem:[%s281 + $0x138] sm:$0xff]
      %v482 = vld [vmem:[%s281 + $0x140] sm:$0xff]
      %v483 = vld [vmem:[%s281 + $0x148] sm:$0xff]
      %v484 = vld [vmem:[%s281 + $0x150] sm:$0xff]
      %v485 = vld [vmem:[%s281 + $0x158] sm:$0xff]
      %v486 = vld [vmem:[%s281 + $0x160] sm:$0xff]
      %v487 = vld [vmem:[%s281 + $0x168] sm:$0xff]
      %v488 = vld [vmem:[%s281 + $0x170] sm:$0xff]
      %v489 = vld [vmem:[%s281 + $0x178] sm:$0xff]
      %v490 = vld [vmem:[%s281 + $0x180] sm:$0xff]
      %v491 = vld [vmem:[%s281 + $0x188] sm:$0xff]
      %v492 = vld [vmem:[%s281 + $0x190] sm:$0xff]
      %v493 = vld [vmem:[%s281 + $0x198] sm:$0xff]
      %v494 = vld [vmem:[%s281 + $0x1a0] sm:$0xff]
      %v495 = vld [vmem:[%s281 + $0x1a8] sm:$0xff]
      %v496 = vld [vmem:[%s281 + $0x1b0] sm:$0xff]
      %v497 = vld [vmem:[%s281 + $0x1b8] sm:$0xff]
      %v498 = vld [vmem:[%s281 + $0x1c0] sm:$0xff]
      %v499 = vld [vmem:[%s281 + $0x1c8] sm:$0xff]
      %v500 = vld [vmem:[%s281 + $0x1d0] sm:$0xff]
      %v501 = vld [vmem:[%s281 + $0x1d8] sm:$0xff]
      %v502 = vld [vmem:[%s281 + $0x1e0] sm:$0xff]
      %v503 = vld [vmem:[%s281 + $0x1e8] sm:$0xff]
      %v504 = vld [vmem:[%s281 + $0x1f0] sm:$0xff]
      %v505 = vld [vmem:[%s281 + $0x1f8] sm:$0xff]
      %v506 = vld [vmem:[%s291] sm:$0xf]
      %v507 = vld [vmem:[%s291 + $0x4] sm:$0xf]
      %v508 = vld [vmem:[%s291 + $0x8] sm:$0xf]
      %v509 = vld [vmem:[%s291 + $0xc] sm:$0xf]
      %v510 = vld [vmem:[%s291 + $0x10] sm:$0xf]
      %v511 = vld [vmem:[%s291 + $0x14] sm:$0xf]
      %v512 = vld [vmem:[%s291 + $0x18] sm:$0xf]
      %v513 = vld [vmem:[%s291 + $0x1c] sm:$0xf]
      %v514 = vld [vmem:[%s291 + $0x20] sm:$0xf]
      %v515 = vld [vmem:[%s291 + $0x24] sm:$0xf]
      %v516 = vld [vmem:[%s291 + $0x28] sm:$0xf]
      %v517 = vld [vmem:[%s291 + $0x2c] sm:$0xf]
      %v518 = vld [vmem:[%s291 + $0x30] sm:$0xf]
      %v519 = vld [vmem:[%s291 + $0x34] sm:$0xf]
      %v520 = vld [vmem:[%s291 + $0x38] sm:$0xf]
      %v521 = vld [vmem:[%s291 + $0x3c] sm:$0xf]
      %v522 = vld [vmem:[%s291 + $0x40] sm:$0xf]
      %v523 = vld [vmem:[%s291 + $0x44] sm:$0xf]
      %v524 = vld [vmem:[%s291 + $0x48] sm:$0xf]
      %v525 = vld [vmem:[%s291 + $0x4c] sm:$0xf]
      %v590 = vunpack.c.l.b16 %v442
      %v591 = vunpack.c.h.b16 %v442
      %v592 = vunpack.c.l.b16 %v443
      %v593 = vunpack.c.h.b16 %v443
      %v594 = vunpack.c.l.b16 %v444
      %v595 = vunpack.c.h.b16 %v444
      %v596 = vunpack.c.l.b16 %v445
      %v597 = vunpack.c.h.b16 %v445
      %v598 = vunpack.c.l.b16 %v446
      %v599 = vunpack.c.h.b16 %v446
      %v600 = vunpack.c.l.b16 %v447
      %v601 = vunpack.c.h.b16 %v447
      %v602 = vunpack.c.l.b16 %v448
      %v603 = vunpack.c.h.b16 %v448
      %v604 = vunpack.c.l.b16 %v449
      %v605 = vunpack.c.h.b16 %v449
      %v606 = vunpack.c.l.b16 %v450
      %v607 = vunpack.c.h.b16 %v450
      %v608 = vunpack.c.l.b16 %v451
      %v609 = vunpack.c.h.b16 %v451
      %v610 = vunpack.c.l.b16 %v452
      %v611 = vunpack.c.h.b16 %v452
      %v612 = vunpack.c.l.b16 %v453
      %v613 = vunpack.c.h.b16 %v453
      %v614 = vunpack.c.l.b16 %v454
      %v615 = vunpack.c.h.b16 %v454
      %v616 = vunpack.c.l.b16 %v455
      %v617 = vunpack.c.h.b16 %v455
      %v618 = vunpack.c.l.b16 %v456
      %v619 = vunpack.c.h.b16 %v456
      %v620 = vunpack.c.l.b16 %v457
      %v621 = vunpack.c.h.b16 %v457
      %v622 = vunpack.c.l.b16 %v458
      %v623 = vunpack.c.h.b16 %v458
      %v624 = vunpack.c.l.b16 %v459
      %v625 = vunpack.c.h.b16 %v459
      %v626 = vunpack.c.l.b16 %v460
      %v627 = vunpack.c.h.b16 %v460
      %v628 = vunpack.c.l.b16 %v461
      %v629 = vunpack.c.h.b16 %v461
      %v630 = vunpack.c.l.b16 %v462
      %v631 = vunpack.c.h.b16 %v462
      %v632 = vunpack.c.l.b16 %v463
      %v633 = vunpack.c.h.b16 %v463
      %v634 = vunpack.c.l.b16 %v464
      %v635 = vunpack.c.h.b16 %v464
      %v636 = vunpack.c.l.b16 %v465
      %v637 = vunpack.c.h.b16 %v465
      %v638 = vunpack.c.l.b16 %v466
      %v639 = vunpack.c.h.b16 %v466
      %v640 = vunpack.c.l.b16 %v467
      %v641 = vunpack.c.h.b16 %v467
      %v642 = vunpack.c.l.b16 %v468
      %v643 = vunpack.c.h.b16 %v468
      %v644 = vunpack.c.l.b16 %v469
      %v645 = vunpack.c.h.b16 %v469
      %v646 = vunpack.c.l.b16 %v470
      %v647 = vunpack.c.h.b16 %v470
      %v648 = vunpack.c.l.b16 %v471
      %v649 = vunpack.c.h.b16 %v471
      %v650 = vunpack.c.l.b16 %v472
      %v651 = vunpack.c.h.b16 %v472
      %v652 = vunpack.c.l.b16 %v473
      %v653 = vunpack.c.h.b16 %v473
      %v654 = vunpack.c.l.b16 %v474
      %v655 = vunpack.c.h.b16 %v474
      %v656 = vunpack.c.l.b16 %v475
      %v657 = vunpack.c.h.b16 %v475
      %v658 = vunpack.c.l.b16 %v476
      %v659 = vunpack.c.h.b16 %v476
      %v660 = vunpack.c.l.b16 %v477
      %v661 = vunpack.c.h.b16 %v477
      %v662 = vunpack.c.l.b16 %v478
      %v663 = vunpack.c.h.b16 %v478
      %v664 = vunpack.c.l.b16 %v479
      %v665 = vunpack.c.h.b16 %v479
      %v666 = vunpack.c.l.b16 %v480
      %v667 = vunpack.c.h.b16 %v480
      %v668 = vunpack.c.l.b16 %v481
      %v669 = vunpack.c.h.b16 %v481
      %v670 = vunpack.c.l.b16 %v482
      %v671 = vunpack.c.h.b16 %v482
      %v672 = vunpack.c.l.b16 %v483
      %v673 = vunpack.c.h.b16 %v483
      %v674 = vunpack.c.l.b16 %v484
      %v675 = vunpack.c.h.b16 %v484
      %v676 = vunpack.c.l.b16 %v485
      %v677 = vunpack.c.h.b16 %v485
      %v678 = vunpack.c.l.b16 %v486
      %v679 = vunpack.c.h.b16 %v486
      %v680 = vunpack.c.l.b16 %v487
      %v681 = vunpack.c.h.b16 %v487
      %v682 = vunpack.c.l.b16 %v488
      %v683 = vunpack.c.h.b16 %v488
      %v684 = vunpack.c.l.b16 %v489
      %v685 = vunpack.c.h.b16 %v489
      %v686 = vunpack.c.l.b16 %v490
      %v687 = vunpack.c.h.b16 %v490
      %v688 = vunpack.c.l.b16 %v491
      %v689 = vunpack.c.h.b16 %v491
      %v690 = vunpack.c.l.b16 %v492
      %v691 = vunpack.c.h.b16 %v492
      %v692 = vunpack.c.l.b16 %v493
      %v693 = vunpack.c.h.b16 %v493
      %v694 = vunpack.c.l.b16 %v494
      %v695 = vunpack.c.h.b16 %v494
      %v696 = vunpack.c.l.b16 %v495
      %v697 = vunpack.c.h.b16 %v495
      %v698 = vunpack.c.l.b16 %v496
      %v699 = vunpack.c.h.b16 %v496
      %v700 = vunpack.c.l.b16 %v497
      %v701 = vunpack.c.h.b16 %v497
      %v702 = vunpack.c.l.b16 %v498
      %v703 = vunpack.c.h.b16 %v498
      %v704 = vunpack.c.l.b16 %v499
      %v705 = vunpack.c.h.b16 %v499
      %v706 = vunpack.c.l.b16 %v500
      %v707 = vunpack.c.h.b16 %v500
      %v708 = vunpack.c.l.b16 %v501
      %v709 = vunpack.c.h.b16 %v501
      %v710 = vunpack.c.l.b16 %v502
      %v711 = vunpack.c.h.b16 %v502
      %v712 = vunpack.c.l.b16 %v503
      %v713 = vunpack.c.h.b16 %v503
      %v714 = vunpack.c.l.b16 %v504
      %v715 = vunpack.c.h.b16 %v504
      %v716 = vunpack.c.l.b16 %v505
      %v717 = vunpack.c.h.b16 %v505
      %v718 = vpack.c.b16 %v592, %v590
      %v719 = vpack.c.b16 %v593, %v591
      %v720 = vpack.c.b16 %v596, %v594
      %v721 = vpack.c.b16 %v597, %v595
      %v722 = vpack.c.b16 %v600, %v598
      %v723 = vpack.c.b16 %v601, %v599
      %v724 = vpack.c.b16 %v604, %v602
      %v725 = vpack.c.b16 %v605, %v603
      %v726 = vpack.c.b16 %v608, %v606
      %v727 = vpack.c.b16 %v609, %v607
      %v728 = vpack.c.b16 %v612, %v610
      %v729 = vpack.c.b16 %v613, %v611
      %v730 = vpack.c.b16 %v616, %v614
      %v731 = vpack.c.b16 %v617, %v615
      %v732 = vpack.c.b16 %v620, %v618
      %v733 = vpack.c.b16 %v621, %v619
      %v734 = vpack.c.b16 %v624, %v622
      %v735 = vpack.c.b16 %v625, %v623
      %v736 = vpack.c.b16 %v628, %v626
      %v737 = vpack.c.b16 %v629, %v627
      %v738 = vpack.c.b16 %v632, %v630
      %v739 = vpack.c.b16 %v633, %v631
      %v740 = vpack.c.b16 %v636, %v634
      %v741 = vpack.c.b16 %v637, %v635
      %v742 = vpack.c.b16 %v640, %v638
      %v743 = vpack.c.b16 %v641, %v639
      %v744 = vpack.c.b16 %v644, %v642
      %v745 = vpack.c.b16 %v645, %v643
      %v746 = vpack.c.b16 %v648, %v646
      %v747 = vpack.c.b16 %v649, %v647
      %v748 = vpack.c.b16 %v652, %v650
      %v749 = vpack.c.b16 %v653, %v651
      %v750 = vpack.c.b16 %v656, %v654
      %v751 = vpack.c.b16 %v657, %v655
      %v752 = vpack.c.b16 %v660, %v658
      %v753 = vpack.c.b16 %v661, %v659
      %v754 = vpack.c.b16 %v664, %v662
      %v755 = vpack.c.b16 %v665, %v663
      %v756 = vpack.c.b16 %v668, %v666
      %v757 = vpack.c.b16 %v669, %v667
      %v758 = vpack.c.b16 %v672, %v670
      %v759 = vpack.c.b16 %v673, %v671
      %v760 = vpack.c.b16 %v676, %v674
      %v761 = vpack.c.b16 %v677, %v675
      %v762 = vpack.c.b16 %v680, %v678
      %v763 = vpack.c.b16 %v681, %v679
      %v764 = vpack.c.b16 %v684, %v682
      %v765 = vpack.c.b16 %v685, %v683
      %v766 = vpack.c.b16 %v688, %v686
      %v767 = vpack.c.b16 %v689, %v687
      %v768 = vpack.c.b16 %v692, %v690
      %v769 = vpack.c.b16 %v693, %v691
      %v770 = vpack.c.b16 %v696, %v694
      %v771 = vpack.c.b16 %v697, %v695
      %v772 = vpack.c.b16 %v700, %v698
      %v773 = vpack.c.b16 %v701, %v699
      %v774 = vpack.c.b16 %v704, %v702
      %v775 = vpack.c.b16 %v705, %v703
      %v776 = vpack.c.b16 %v708, %v706
      %v777 = vpack.c.b16 %v709, %v707
      %v778 = vpack.c.b16 %v712, %v710
      %v779 = vpack.c.b16 %v713, %v711
      %v780 = vpack.c.b16 %v716, %v714
      %v781 = vpack.c.b16 %v717, %v715
      %v834 = vunpack.c.l.b16 %v506
      %v835 = vunpack.c.l.b16 %v507
      %v836 = vunpack.c.l.b16 %v508
      %v837 = vunpack.c.l.b16 %v509
      %v838 = vunpack.c.l.b16 %v510
      %v839 = vunpack.c.l.b16 %v511
      %v840 = vunpack.c.l.b16 %v512
      %v841 = vunpack.c.l.b16 %v513
      %v842 = vunpack.c.l.b16 %v514
      %v843 = vunpack.c.l.b16 %v515
      %v844 = vunpack.c.l.b16 %v516
      %v845 = vunpack.c.l.b16 %v517
      %v846 = vunpack.c.l.b16 %v518
      %v847 = vunpack.c.l.b16 %v519
      %v848 = vunpack.c.l.b16 %v520
      %v849 = vunpack.c.l.b16 %v521
      %v850 = vunpack.c.l.b16 %v522
      %v851 = vunpack.c.l.b16 %v523
      %v852 = vunpack.c.l.b16 %v524
      %v853 = vunpack.c.l.b16 %v525
      %v854 = vpack.c.b16 %v835, %v834
      %v855 = vpack.c.b16 %v837, %v836
      %v856 = vpack.c.b16 %v839, %v838
      %v857 = vpack.c.b16 %v841, %v840
      %v858 = vpack.c.b16 %v843, %v842
      %v859 = vpack.c.b16 %v845, %v844
      %v860 = vpack.c.b16 %v847, %v846
      %v861 = vpack.c.b16 %v849, %v848
      %v862 = vpack.c.b16 %v851, %v850
      %v863 = vpack.c.b16 %v853, %v852
      %vm874 = vcmask 261120
      %v876 = vsel %vm874, %v719, 0
      %v879 = vsel %vm874, %v721, 0
      %v882 = vsel %vm874, %v723, 0
      %v885 = vsel %vm874, %v725, 0
      %v888 = vsel %vm874, %v727, 0
      %v891 = vsel %vm874, %v729, 0
      %v894 = vsel %vm874, %v731, 0
      %v897 = vsel %vm874, %v733, 0
      %v900 = vsel %vm874, %v735, 0
      %v903 = vsel %vm874, %v737, 0
      %v906 = vsel %vm874, %v739, 0
      %v909 = vsel %vm874, %v741, 0
      %v912 = vsel %vm874, %v743, 0
      %v915 = vsel %vm874, %v745, 0
      %v918 = vsel %vm874, %v747, 0
      %v921 = vsel %vm874, %v749, 0
      %v924 = vsel %vm874, %v751, 0
      %v927 = vsel %vm874, %v753, 0
      %v930 = vsel %vm874, %v755, 0
      %v933 = vsel %vm874, %v757, 0
      %v936 = vsel %vm874, %v759, 0
      %v939 = vsel %vm874, %v761, 0
      %v942 = vsel %vm874, %v763, 0
      %v945 = vsel %vm874, %v765, 0
      %v948 = vsel %vm874, %v767, 0
      %v951 = vsel %vm874, %v769, 0
      %v954 = vsel %vm874, %v771, 0
      %v957 = vsel %vm874, %v773, 0
      %v960 = vsel %vm874, %v775, 0
      %v963 = vsel %vm874, %v777, 0
      %v966 = vsel %vm874, %v779, 0
      %v969 = vsel %vm874, %v781, 0
      %971 = vmatprep.subr.bf16.mxu0 0
      %972 = vmatpush1.bf16.msra.mxu0 %v854
      %973 = vmatprep.subr.bf16.mxu0 0
      %974 = vmatpush1.bf16.msra.mxu0 %v855
      %975 = vmatprep.subr.bf16.mxu0 0
      %976 = vmatpush1.bf16.msra.mxu0 %v856
      %977 = vmatprep.subr.bf16.mxu0 0
      %978 = vmatpush1.bf16.msra.mxu0 %v857
      %979 = vmatprep.subr.bf16.mxu0 0
      %980 = vmatpush1.bf16.msra.mxu0 %v858
      %981 = vmatprep.subr.bf16.mxu0 0
      %982 = vmatpush1.bf16.msra.mxu0 %v859
      %983 = vmatprep.subr.bf16.mxu0 0
      %984 = vmatpush1.bf16.msra.mxu0 %v860
      %985 = vmatprep.subr.bf16.mxu0 0
      %986 = vmatpush1.bf16.msra.mxu0 %v861
      %987 = vmatprep.subr.bf16.mxu0 0
      %988 = vmatpush1.bf16.msra.mxu0 %v862
      %989 = vmatprep.subr.bf16.mxu0 0
      %990 = vmatpush1.bf16.msra.mxu0 %v863
      %991 = vmatprep.subr.bf16.mxu0 0
      %992 = vmatpush1.bf16.msra.mxu0 0
      %993 = vmatprep.subr.bf16.mxu0 0
      %994 = vmatpush1.bf16.msra.mxu0 0
      %995 = vmatprep.subr.bf16.mxu0 0
      %996 = vmatpush1.bf16.msra.mxu0 0
      %997 = vmatprep.subr.bf16.mxu0 0
      %998 = vmatpush1.bf16.msra.mxu0 0
      %999 = vmatprep.subr.bf16.mxu0 0
      %1000 = vmatpush1.bf16.msra.mxu0 0
      %1001 = vmatprep.subr.bf16.mxu0 0
      %1002 = vmatpush1.bf16.msra.mxu0 0
      %1003 = vmatprep.mubr.bf16.mxu0 %v876
      %1004 = vmatmul.mubr.bf16.gmra.mrb[0].mxu0 %v718
      %v1005 = vpop.f32.mrb[0].mxu0
      %v1006 = vadd.f32 0.0, %v1005
      %v1007 = vpop.f32.mrb[0].mxu0
      %v1008 = vpop.f32.mrb[0].mxu0
      %v1009 = vadd.f32 0.0, %v1008
      %v1010 = vpop.f32.mrb[0].mxu0
      %1011 = vmatprep.mubr.bf16.mxu0 %v879
      %1012 = vmatmul.mubr.bf16.gmra.mrb[0].mxu0 %v720
      %v1013 = vpop.f32.mrb[0].mxu0
      %v1014 = vadd.f32 0.0, %v1013
      %v1015 = vpop.f32.mrb[0].mxu0
      %v1016 = vpop.f32.mrb[0].mxu0
      %v1017 = vadd.f32 0.0, %v1016
      %v1018 = vpop.f32.mrb[0].mxu0
      %1019 = vmatprep.mubr.bf16.mxu0 %v882
      %1020 = vmatmul.mubr.bf16.gmra.mrb[0].mxu0 %v722
      %v1021 = vpop.f32.mrb[0].mxu0
      %v1022 = vadd.f32 0.0, %v1021
      %v1023 = vpop.f32.mrb[0].mxu0
      %v1024 = vpop.f32.mrb[0].mxu0
      %v1025 = vadd.f32 0.0, %v1024
      %v1026 = vpop.f32.mrb[0].mxu0
      %1027 = vmatprep.mubr.bf16.mxu0 %v885
      %1028 = vmatmul.mubr.bf16.gmra.mrb[0].mxu0 %v724
      %v1029 = vpop.f32.mrb[0].mxu0
      %v1030 = vadd.f32 0.0, %v1029
      %v1031 = vpop.f32.mrb[0].mxu0
      %v1032 = vpop.f32.mrb[0].mxu0
      %v1033 = vadd.f32 0.0, %v1032
      %v1034 = vpop.f32.mrb[0].mxu0
      %1035 = vmatprep.mubr.bf16.mxu0 %v888
      %1036 = vmatmul.mubr.bf16.gmra.mrb[0].mxu0 %v726
      %v1037 = vpop.f32.mrb[0].mxu0
      %v1038 = vadd.f32 0.0, %v1037
      %v1039 = vpop.f32.mrb[0].mxu0
      %v1040 = vpop.f32.mrb[0].mxu0
      %v1041 = vadd.f32 0.0, %v1040
      %v1042 = vpop.f32.mrb[0].mxu0
      %1043 = vmatprep.mubr.bf16.mxu0 %v891
      %1044 = vmatmul.mubr.bf16.gmra.mrb[0].mxu0 %v728
      %v1045 = vpop.f32.mrb[0].mxu0
      %v1046 = vadd.f32 0.0, %v1045
      %v1047 = vpop.f32.mrb[0].mxu0
      %v1048 = vpop.f32.mrb[0].mxu0
      %v1049 = vadd.f32 0.0, %v1048
      %v1050 = vpop.f32.mrb[0].mxu0
      %1051 = vmatprep.mubr.bf16.mxu0 %v894
      %1052 = vmatmul.mubr.bf16.gmra.mrb[0].mxu0 %v730
      %v1053 = vpop.f32.mrb[0].mxu0
      %v1054 = vadd.f32 0.0, %v1053
      %v1055 = vpop.f32.mrb[0].mxu0
      %v1056 = vpop.f32.mrb[0].mxu0
      %v1057 = vadd.f32 0.0, %v1056
      %v1058 = vpop.f32.mrb[0].mxu0
      %1059 = vmatprep.mubr.bf16.mxu0 %v897
      %1060 = vmatmul.mubr.bf16.gmra.mrb[0].mxu0 %v732
      %v1061 = vpop.f32.mrb[0].mxu0
      %v1062 = vadd.f32 0.0, %v1061
      %v1063 = vpop.f32.mrb[0].mxu0
      %v1064 = vpop.f32.mrb[0].mxu0
      %v1065 = vadd.f32 0.0, %v1064
      %v1066 = vpop.f32.mrb[0].mxu0
      %1067 = vmatprep.mubr.bf16.mxu0 %v900
      %1068 = vmatmul.mubr.bf16.gmra.mrb[0].mxu0 %v734
      %v1069 = vpop.f32.mrb[0].mxu0
      %v1070 = vadd.f32 0.0, %v1069
      %v1071 = vpop.f32.mrb[0].mxu0
      %v1072 = vpop.f32.mrb[0].mxu0
      %v1073 = vadd.f32 0.0, %v1072
      %v1074 = vpop.f32.mrb[0].mxu0
      %1075 = vmatprep.mubr.bf16.mxu0 %v903
      %1076 = vmatmul.mubr.bf16.gmra.mrb[0].mxu0 %v736
      %v1077 = vpop.f32.mrb[0].mxu0
      %v1078 = vadd.f32 0.0, %v1077
      %v1079 = vpop.f32.mrb[0].mxu0
      %v1080 = vpop.f32.mrb[0].mxu0
      %v1081 = vadd.f32 0.0, %v1080
      %v1082 = vpop.f32.mrb[0].mxu0
      %1083 = vmatprep.mubr.bf16.mxu0 %v906
      %1084 = vmatmul.mubr.bf16.gmra.mrb[0].mxu0 %v738
      %v1085 = vpop.f32.mrb[0].mxu0
      %v1086 = vadd.f32 0.0, %v1085
      %v1087 = vpop.f32.mrb[0].mxu0
      %v1088 = vpop.f32.mrb[0].mxu0
      %v1089 = vadd.f32 0.0, %v1088
      %v1090 = vpop.f32.mrb[0].mxu0
      %1091 = vmatprep.mubr.bf16.mxu0 %v909
      %1092 = vmatmul.mubr.bf16.gmra.mrb[0].mxu0 %v740
      %v1093 = vpop.f32.mrb[0].mxu0
      %v1094 = vadd.f32 0.0, %v1093
      %v1095 = vpop.f32.mrb[0].mxu0
      %v1096 = vpop.f32.mrb[0].mxu0
      %v1097 = vadd.f32 0.0, %v1096
      %v1098 = vpop.f32.mrb[0].mxu0
      %1099 = vmatprep.mubr.bf16.mxu0 %v912
      %1100 = vmatmul.mubr.bf16.gmra.mrb[0].mxu0 %v742
      %v1101 = vpop.f32.mrb[0].mxu0
      %v1102 = vadd.f32 0.0, %v1101
      %v1103 = vpop.f32.mrb[0].mxu0
      %v1104 = vpop.f32.mrb[0].mxu0
      %v1105 = vadd.f32 0.0, %v1104
      %v1106 = vpop.f32.mrb[0].mxu0
      %1107 = vmatprep.mubr.bf16.mxu0 %v915
      %1108 = vmatmul.mubr.bf16.gmra.mrb[0].mxu0 %v744
      %v1109 = vpop.f32.mrb[0].mxu0
      %v1110 = vadd.f32 0.0, %v1109
      %v1111 = vpop.f32.mrb[0].mxu0
      %v1112 = vpop.f32.mrb[0].mxu0
      %v1113 = vadd.f32 0.0, %v1112
      %v1114 = vpop.f32.mrb[0].mxu0
      %1115 = vmatprep.mubr.bf16.mxu0 %v918
      %1116 = vmatmul.mubr.bf16.gmra.mrb[0].mxu0 %v746
      %v1117 = vpop.f32.mrb[0].mxu0
      %v1118 = vadd.f32 0.0, %v1117
      %v1119 = vpop.f32.mrb[0].mxu0
      %v1120 = vpop.f32.mrb[0].mxu0
      %v1121 = vadd.f32 0.0, %v1120
      %v1122 = vpop.f32.mrb[0].mxu0
      %1123 = vmatprep.mubr.bf16.mxu0 %v921
      %1124 = vmatmul.mubr.bf16.gmra.mrb[0].mxu0 %v748
      %v1125 = vpop.f32.mrb[0].mxu0
      %v1126 = vadd.f32 0.0, %v1125
      %v1127 = vpop.f32.mrb[0].mxu0
      %v1128 = vpop.f32.mrb[0].mxu0
      %v1129 = vadd.f32 0.0, %v1128
      %v1130 = vpop.f32.mrb[0].mxu0
      %1131 = vmatprep.mubr.bf16.mxu0 %v924
      %1132 = vmatmul.mubr.bf16.gmra.mrb[0].mxu0 %v750
      %v1133 = vpop.f32.mrb[0].mxu0
      %v1134 = vadd.f32 0.0, %v1133
      %v1135 = vpop.f32.mrb[0].mxu0
      %v1136 = vpop.f32.mrb[0].mxu0
      %v1137 = vadd.f32 0.0, %v1136
      %v1138 = vpop.f32.mrb[0].mxu0
      %1139 = vmatprep.mubr.bf16.mxu0 %v927
      %1140 = vmatmul.mubr.bf16.gmra.mrb[0].mxu0 %v752
      %v1141 = vpop.f32.mrb[0].mxu0
      %v1142 = vadd.f32 0.0, %v1141
      %v1143 = vpop.f32.mrb[0].mxu0
      %v1144 = vpop.f32.mrb[0].mxu0
      %v1145 = vadd.f32 0.0, %v1144
      %v1146 = vpop.f32.mrb[0].mxu0
      %1147 = vmatprep.mubr.bf16.mxu0 %v930
      %1148 = vmatmul.mubr.bf16.gmra.mrb[0].mxu0 %v754
      %v1149 = vpop.f32.mrb[0].mxu0
      %v1150 = vadd.f32 0.0, %v1149
      %v1151 = vpop.f32.mrb[0].mxu0
      %v1152 = vpop.f32.mrb[0].mxu0
      %v1153 = vadd.f32 0.0, %v1152
      %v1154 = vpop.f32.mrb[0].mxu0
      %1155 = vmatprep.mubr.bf16.mxu0 %v933
      %1156 = vmatmul.mubr.bf16.gmra.mrb[0].mxu0 %v756
      %v1157 = vpop.f32.mrb[0].mxu0
      %v1158 = vadd.f32 0.0, %v1157
      %v1159 = vpop.f32.mrb[0].mxu0
      %v1160 = vpop.f32.mrb[0].mxu0
      %v1161 = vadd.f32 0.0, %v1160
      %v1162 = vpop.f32.mrb[0].mxu0
      %1163 = vmatprep.mubr.bf16.mxu0 %v936
      %1164 = vmatmul.mubr.bf16.gmra.mrb[0].mxu0 %v758
      %v1165 = vpop.f32.mrb[0].mxu0
      %v1166 = vadd.f32 0.0, %v1165
      %v1167 = vpop.f32.mrb[0].mxu0
      %v1168 = vpop.f32.mrb[0].mxu0
      %v1169 = vadd.f32 0.0, %v1168
      %v1170 = vpop.f32.mrb[0].mxu0
      %1171 = vmatprep.mubr.bf16.mxu0 %v939
      %1172 = vmatmul.mubr.bf16.gmra.mrb[0].mxu0 %v760
      %v1173 = vpop.f32.mrb[0].mxu0
      %v1174 = vadd.f32 0.0, %v1173
      %v1175 = vpop.f32.mrb[0].mxu0
      %v1176 = vpop.f32.mrb[0].mxu0
      %v1177 = vadd.f32 0.0, %v1176
      %v1178 = vpop.f32.mrb[0].mxu0
      %1179 = vmatprep.mubr.bf16.mxu0 %v942
      %1180 = vmatmul.mubr.bf16.gmra.mrb[0].mxu0 %v762
      %v1181 = vpop.f32.mrb[0].mxu0
      %v1182 = vadd.f32 0.0, %v1181
      %v1183 = vpop.f32.mrb[0].mxu0
      %v1184 = vpop.f32.mrb[0].mxu0
      %v1185 = vadd.f32 0.0, %v1184
      %v1186 = vpop.f32.mrb[0].mxu0
      %1187 = vmatprep.mubr.bf16.mxu0 %v945
      %1188 = vmatmul.mubr.bf16.gmra.mrb[0].mxu0 %v764
      %v1189 = vpop.f32.mrb[0].mxu0
      %v1190 = vadd.f32 0.0, %v1189
      %v1191 = vpop.f32.mrb[0].mxu0
      %v1192 = vpop.f32.mrb[0].mxu0
      %v1193 = vadd.f32 0.0, %v1192
      %v1194 = vpop.f32.mrb[0].mxu0
      %1195 = vmatprep.mubr.bf16.mxu0 %v948
      %1196 = vmatmul.mubr.bf16.gmra.mrb[0].mxu0 %v766
      %v1197 = vpop.f32.mrb[0].mxu0
      %v1198 = vadd.f32 0.0, %v1197
      %v1199 = vpop.f32.mrb[0].mxu0
      %v1200 = vpop.f32.mrb[0].mxu0
      %v1201 = vadd.f32 0.0, %v1200
      %v1202 = vpop.f32.mrb[0].mxu0
      %1203 = vmatprep.mubr.bf16.mxu0 %v951
      %1204 = vmatmul.mubr.bf16.gmra.mrb[0].mxu0 %v768
      %v1205 = vpop.f32.mrb[0].mxu0
      %v1206 = vadd.f32 0.0, %v1205
      %v1207 = vpop.f32.mrb[0].mxu0
      %v1208 = vpop.f32.mrb[0].mxu0
      %v1209 = vadd.f32 0.0, %v1208
      %v1210 = vpop.f32.mrb[0].mxu0
      %1211 = vmatprep.mubr.bf16.mxu0 %v954
      %1212 = vmatmul.mubr.bf16.gmra.mrb[0].mxu0 %v770
      %v1213 = vpop.f32.mrb[0].mxu0
      %v1214 = vadd.f32 0.0, %v1213
      %v1215 = vpop.f32.mrb[0].mxu0
      %v1216 = vpop.f32.mrb[0].mxu0
      %v1217 = vadd.f32 0.0, %v1216
      %v1218 = vpop.f32.mrb[0].mxu0
      %1219 = vmatprep.mubr.bf16.mxu0 %v957
      %1220 = vmatmul.mubr.bf16.gmra.mrb[0].mxu0 %v772
      %v1221 = vpop.f32.mrb[0].mxu0
      %v1222 = vadd.f32 0.0, %v1221
      %v1223 = vpop.f32.mrb[0].mxu0
      %v1224 = vpop.f32.mrb[0].mxu0
      %v1225 = vadd.f32 0.0, %v1224
      %v1226 = vpop.f32.mrb[0].mxu0
      %1227 = vmatprep.mubr.bf16.mxu0 %v960
      %1228 = vmatmul.mubr.bf16.gmra.mrb[0].mxu0 %v774
      %v1229 = vpop.f32.mrb[0].mxu0
      %v1230 = vadd.f32 0.0, %v1229
      %v1231 = vpop.f32.mrb[0].mxu0
      %v1232 = vpop.f32.mrb[0].mxu0
      %v1233 = vadd.f32 0.0, %v1232
      %v1234 = vpop.f32.mrb[0].mxu0
      %1235 = vmatprep.mubr.bf16.mxu0 %v963
      %1236 = vmatmul.mubr.bf16.gmra.mrb[0].mxu0 %v776
      %v1237 = vpop.f32.mrb[0].mxu0
      %v1238 = vadd.f32 0.0, %v1237
      %v1239 = vpop.f32.mrb[0].mxu0
      %v1240 = vpop.f32.mrb[0].mxu0
      %v1241 = vadd.f32 0.0, %v1240
      %v1242 = vpop.f32.mrb[0].mxu0
      %1243 = vmatprep.mubr.bf16.mxu0 %v966
      %1244 = vmatmul.mubr.bf16.gmra.mrb[0].mxu0 %v778
      %v1245 = vpop.f32.mrb[0].mxu0
      %v1246 = vadd.f32 0.0, %v1245
      %v1247 = vpop.f32.mrb[0].mxu0
      %v1248 = vpop.f32.mrb[0].mxu0
      %v1249 = vadd.f32 0.0, %v1248
      %v1250 = vpop.f32.mrb[0].mxu0
      %1251 = vmatprep.mubr.bf16.mxu0 %v969
      %1252 = vmatmul.mubr.bf16.gmra.mrb[0].mxu0 %v780
      %v1253 = vpop.f32.mrb[0].mxu0
      %v1254 = vadd.f32 0.0, %v1253
      %v1255 = vpop.f32.mrb[0].mxu0
      %v1256 = vpop.f32.mrb[0].mxu0
      %v1257 = vadd.f32 0.0, %v1256
      %v1258 = vpop.f32.mrb[0].mxu0
      %1259 = vdwg.mxu0
      %v1260 = vadd.f32 %v378, %v1006
      %v1261 = vadd.f32 %v379, %v1009
      %v1262 = vadd.f32 %v380, %v1014
      %v1263 = vadd.f32 %v381, %v1017
      %v1264 = vadd.f32 %v382, %v1022
      %v1265 = vadd.f32 %v383, %v1025
      %v1266 = vadd.f32 %v384, %v1030
      %v1267 = vadd.f32 %v385, %v1033
      %v1268 = vadd.f32 %v386, %v1038
      %v1269 = vadd.f32 %v387, %v1041
      %v1270 = vadd.f32 %v388, %v1046
      %v1271 = vadd.f32 %v389, %v1049
      %v1272 = vadd.f32 %v390, %v1054
      %v1273 = vadd.f32 %v391, %v1057
      %v1274 = vadd.f32 %v392, %v1062
      %v1275 = vadd.f32 %v393, %v1065
      %v1276 = vadd.f32 %v394, %v1070
      %v1277 = vadd.f32 %v395, %v1073
      %v1278 = vadd.f32 %v396, %v1078
      %v1279 = vadd.f32 %v397, %v1081
      %v1280 = vadd.f32 %v398, %v1086
      %v1281 = vadd.f32 %v399, %v1089
      %v1282 = vadd.f32 %v400, %v1094
      %v1283 = vadd.f32 %v401, %v1097
      %v1284 = vadd.f32 %v402, %v1102
      %v1285 = vadd.f32 %v403, %v1105
      %v1286 = vadd.f32 %v404, %v1110
      %v1287 = vadd.f32 %v405, %v1113
      %v1288 = vadd.f32 %v406, %v1118
      %v1289 = vadd.f32 %v407, %v1121
      %v1290 = vadd.f32 %v408, %v1126
      %v1291 = vadd.f32 %v409, %v1129
      %v1292 = vadd.f32 %v410, %v1134
      %v1293 = vadd.f32 %v411, %v1137
      %v1294 = vadd.f32 %v412, %v1142
      %v1295 = vadd.f32 %v413, %v1145
      %v1296 = vadd.f32 %v414, %v1150
      %v1297 = vadd.f32 %v415, %v1153
      %v1298 = vadd.f32 %v416, %v1158
      %v1299 = vadd.f32 %v417, %v1161
      %v1300 = vadd.f32 %v418, %v1166
      %v1301 = vadd.f32 %v419, %v1169
      %v1302 = vadd.f32 %v420, %v1174
      %v1303 = vadd.f32 %v421, %v1177
      %v1304 = vadd.f32 %v422, %v1182
      %v1305 = vadd.f32 %v423, %v1185
      %v1306 = vadd.f32 %v424, %v1190
      %v1307 = vadd.f32 %v425, %v1193
      %v1308 = vadd.f32 %v426, %v1198
      %v1309 = vadd.f32 %v427, %v1201
      %v1310 = vadd.f32 %v428, %v1206
      %v1311 = vadd.f32 %v429, %v1209
      %v1312 = vadd.f32 %v430, %v1214
      %v1313 = vadd.f32 %v431, %v1217
      %v1314 = vadd.f32 %v432, %v1222
      %v1315 = vadd.f32 %v433, %v1225
      %v1316 = vadd.f32 %v434, %v1230
      %v1317 = vadd.f32 %v435, %v1233
      %v1318 = vadd.f32 %v436, %v1238
      %v1319 = vadd.f32 %v437, %v1241
      %v1320 = vadd.f32 %v438, %v1246
      %v1321 = vadd.f32 %v439, %v1249
      %v1322 = vadd.f32 %v440, %v1254
      %v1323 = vadd.f32 %v441, %v1257
      %vm1324 = vcmask 523264
      %1325 = vst.msk [vmem:[#allocation2] sm:$0xff] %vm1324, %v1260
      %1326 = vst.msk [vmem:[#allocation2 + $0x8] sm:$0xff] %vm1324, %v1261
      %1327 = vst.msk [vmem:[#allocation2 + $0x10] sm:$0xff] %vm1324, %v1262
      %1328 = vst.msk [vmem:[#allocation2 + $0x18] sm:$0xff] %vm1324, %v1263
      %1329 = vst.msk [vmem:[#allocation2 + $0x20] sm:$0xff] %vm1324, %v1264
      %1330 = vst.msk [vmem:[#allocation2 + $0x28] sm:$0xff] %vm1324, %v1265
      %1331 = vst.msk [vmem:[#allocation2 + $0x30] sm:$0xff] %vm1324, %v1266
      %1332 = vst.msk [vmem:[#allocation2 + $0x38] sm:$0xff] %vm1324, %v1267
      %1333 = vst.msk [vmem:[#allocation2 + $0x40] sm:$0xff] %vm1324, %v1268
      %1334 = vst.msk [vmem:[#allocation2 + $0x48] sm:$0xff] %vm1324, %v1269
      %1335 = vst.msk [vmem:[#allocation2 + $0x50] sm:$0xff] %vm1324, %v1270
      %1336 = vst.msk [vmem:[#allocation2 + $0x58] sm:$0xff] %vm1324, %v1271
      %1337 = vst.msk [vmem:[#allocation2 + $0x60] sm:$0xff] %vm1324, %v1272
      %1338 = vst.msk [vmem:[#allocation2 + $0x68] sm:$0xff] %vm1324, %v1273
      %1339 = vst.msk [vmem:[#allocation2 + $0x70] sm:$0xff] %vm1324, %v1274
      %1340 = vst.msk [vmem:[#allocation2 + $0x78] sm:$0xff] %vm1324, %v1275
      %1341 = vst.msk [vmem:[#allocation2 + $0x80] sm:$0xff] %vm1324, %v1276
      %1342 = vst.msk [vmem:[#allocation2 + $0x88] sm:$0xff] %vm1324, %v1277
      %1343 = vst.msk [vmem:[#allocation2 + $0x90] sm:$0xff] %vm1324, %v1278
      %1344 = vst.msk [vmem:[#allocation2 + $0x98] sm:$0xff] %vm1324, %v1279
      %1345 = vst.msk [vmem:[#allocation2 + $0xa0] sm:$0xff] %vm1324, %v1280
      %1346 = vst.msk [vmem:[#allocation2 + $0xa8] sm:$0xff] %vm1324, %v1281
      %1347 = vst.msk [vmem:[#allocation2 + $0xb0] sm:$0xff] %vm1324, %v1282
      %1348 = vst.msk [vmem:[#allocation2 + $0xb8] sm:$0xff] %vm1324, %v1283
      %1349 = vst.msk [vmem:[#allocation2 + $0xc0] sm:$0xff] %vm1324, %v1284
      %1350 = vst.msk [vmem:[#allocation2 + $0xc8] sm:$0xff] %vm1324, %v1285
      %1351 = vst.msk [vmem:[#allocation2 + $0xd0] sm:$0xff] %vm1324, %v1286
      %1352 = vst.msk [vmem:[#allocation2 + $0xd8] sm:$0xff] %vm1324, %v1287
      %1353 = vst.msk [vmem:[#allocation2 + $0xe0] sm:$0xff] %vm1324, %v1288
      %1354 = vst.msk [vmem:[#allocation2 + $0xe8] sm:$0xff] %vm1324, %v1289
      %1355 = vst.msk [vmem:[#allocation2 + $0xf0] sm:$0xff] %vm1324, %v1290
      %1356 = vst.msk [vmem:[#allocation2 + $0xf8] sm:$0xff] %vm1324, %v1291
      %1357 = vst.msk [vmem:[#allocation2 + $0x100] sm:$0xff] %vm1324, %v1292
      %1358 = vst.msk [vmem:[#allocation2 + $0x108] sm:$0xff] %vm1324, %v1293
      %1359 = vst.msk [vmem:[#allocation2 + $0x110] sm:$0xff] %vm1324, %v1294
      %1360 = vst.msk [vmem:[#allocation2 + $0x118] sm:$0xff] %vm1324, %v1295
      %1361 = vst.msk [vmem:[#allocation2 + $0x120] sm:$0xff] %vm1324, %v1296
      %1362 = vst.msk [vmem:[#allocation2 + $0x128] sm:$0xff] %vm1324, %v1297
      %1363 = vst.msk [vmem:[#allocation2 + $0x130] sm:$0xff] %vm1324, %v1298
      %1364 = vst.msk [vmem:[#allocation2 + $0x138] sm:$0xff] %vm1324, %v1299
      %1365 = vst.msk [vmem:[#allocation2 + $0x140] sm:$0xff] %vm1324, %v1300
      %1366 = vst.msk [vmem:[#allocation2 + $0x148] sm:$0xff] %vm1324, %v1301
      %1367 = vst.msk [vmem:[#allocation2 + $0x150] sm:$0xff] %vm1324, %v1302
      %1368 = vst.msk [vmem:[#allocation2 + $0x158] sm:$0xff] %vm1324, %v1303
      %1369 = vst.msk [vmem:[#allocation2 + $0x160] sm:$0xff] %vm1324, %v1304
      %1370 = vst.msk [vmem:[#allocation2 + $0x168] sm:$0xff] %vm1324, %v1305
      %1371 = vst.msk [vmem:[#allocation2 + $0x170] sm:$0xff] %vm1324, %v1306
      %1372 = vst.msk [vmem:[#allocation2 + $0x178] sm:$0xff] %vm1324, %v1307
      %1373 = vst.msk [vmem:[#allocation2 + $0x180] sm:$0xff] %vm1324, %v1308
      %1374 = vst.msk [vmem:[#allocation2 + $0x188] sm:$0xff] %vm1324, %v1309
      %1375 = vst.msk [vmem:[#allocation2 + $0x190] sm:$0xff] %vm1324, %v1310
      %1376 = vst.msk [vmem:[#allocation2 + $0x198] sm:$0xff] %vm1324, %v1311
      %1377 = vst.msk [vmem:[#allocation2 + $0x1a0] sm:$0xff] %vm1324, %v1312
      %1378 = vst.msk [vmem:[#allocation2 + $0x1a8] sm:$0xff] %vm1324, %v1313
      %1379 = vst.msk [vmem:[#allocation2 + $0x1b0] sm:$0xff] %vm1324, %v1314
      %1380 = vst.msk [vmem:[#allocation2 + $0x1b8] sm:$0xff] %vm1324, %v1315
      %1381 = vst.msk [vmem:[#allocation2 + $0x1c0] sm:$0xff] %vm1324, %v1316
      %1382 = vst.msk [vmem:[#allocation2 + $0x1c8] sm:$0xff] %vm1324, %v1317
      %1383 = vst.msk [vmem:[#allocation2 + $0x1d0] sm:$0xff] %vm1324, %v1318
      %1384 = vst.msk [vmem:[#allocation2 + $0x1d8] sm:$0xff] %vm1324, %v1319
      %1385 = vst.msk [vmem:[#allocation2 + $0x1e0] sm:$0xff] %vm1324, %v1320
      %1386 = vst.msk [vmem:[#allocation2 + $0x1e8] sm:$0xff] %vm1324, %v1321
      %1387 = vst.msk [vmem:[#allocation2 + $0x1f0] sm:$0xff] %vm1324, %v1322
      %1388 = vst.msk [vmem:[#allocation2 + $0x1f8] sm:$0xff] %vm1324, %v1323
      // Predicated region
      $region41: #{tpu_custom_call.1} parent=35 // pred_check
        %p1389 = pneg %p309
      $region42: #{tpu_custom_call.1} parent=35 // pred_check_branch
        %1391 = sbr.rel (%p1389) target = $region44
      $region43: #{tpu_custom_call.1} parent=35 // pred_region
        %v1392 = vld [vmem:[#allocation2] sm:$0xff]
        %v1393 = vld [vmem:[#allocation2 + $0x8] sm:$0xff]
        %v1394 = vld [vmem:[#allocation2 + $0x10] sm:$0xff]
        %v1395 = vld [vmem:[#allocation2 + $0x18] sm:$0xff]
        %v1396 = vld [vmem:[#allocation2 + $0x20] sm:$0xff]
        %v1397 = vld [vmem:[#allocation2 + $0x28] sm:$0xff]
        %v1398 = vld [vmem:[#allocation2 + $0x30] sm:$0xff]
        %v1399 = vld [vmem:[#allocation2 + $0x38] sm:$0xff]
        %v1400 = vld [vmem:[#allocation2 + $0x40] sm:$0xff]
        %v1401 = vld [vmem:[#allocation2 + $0x48] sm:$0xff]
        %v1402 = vld [vmem:[#allocation2 + $0x50] sm:$0xff]
        %v1403 = vld [vmem:[#allocation2 + $0x58] sm:$0xff]
        %v1404 = vld [vmem:[#allocation2 + $0x60] sm:$0xff]
        %v1405 = vld [vmem:[#allocation2 + $0x68] sm:$0xff]
        %v1406 = vld [vmem:[#allocation2 + $0x70] sm:$0xff]
        %v1407 = vld [vmem:[#allocation2 + $0x78] sm:$0xff]
        %v1408 = vld [vmem:[#allocation2 + $0x80] sm:$0xff]
        %v1409 = vld [vmem:[#allocation2 + $0x88] sm:$0xff]
        %v1410 = vld [vmem:[#allocation2 + $0x90] sm:$0xff]
        %v1411 = vld [vmem:[#allocation2 + $0x98] sm:$0xff]
        %v1412 = vld [vmem:[#allocation2 + $0xa0] sm:$0xff]
        %v1413 = vld [vmem:[#allocation2 + $0xa8] sm:$0xff]
        %v1414 = vld [vmem:[#allocation2 + $0xb0] sm:$0xff]
        %v1415 = vld [vmem:[#allocation2 + $0xb8] sm:$0xff]
        %v1416 = vld [vmem:[#allocation2 + $0xc0] sm:$0xff]
        %v1417 = vld [vmem:[#allocation2 + $0xc8] sm:$0xff]
        %v1418 = vld [vmem:[#allocation2 + $0xd0] sm:$0xff]
        %v1419 = vld [vmem:[#allocation2 + $0xd8] sm:$0xff]
        %v1420 = vld [vmem:[#allocation2 + $0xe0] sm:$0xff]
        %v1421 = vld [vmem:[#allocation2 + $0xe8] sm:$0xff]
        %v1422 = vld [vmem:[#allocation2 + $0xf0] sm:$0xff]
        %v1423 = vld [vmem:[#allocation2 + $0xf8] sm:$0xff]
        %v1424 = vld [vmem:[#allocation2 + $0x100] sm:$0xff]
        %v1425 = vld [vmem:[#allocation2 + $0x108] sm:$0xff]
        %v1426 = vld [vmem:[#allocation2 + $0x110] sm:$0xff]
        %v1427 = vld [vmem:[#allocation2 + $0x118] sm:$0xff]
        %v1428 = vld [vmem:[#allocation2 + $0x120] sm:$0xff]
        %v1429 = vld [vmem:[#allocation2 + $0x128] sm:$0xff]
        %v1430 = vld [vmem:[#allocation2 + $0x130] sm:$0xff]
        %v1431 = vld [vmem:[#allocation2 + $0x138] sm:$0xff]
        %v1432 = vld [vmem:[#allocation2 + $0x140] sm:$0xff]
        %v1433 = vld [vmem:[#allocation2 + $0x148] sm:$0xff]
        %v1434 = vld [vmem:[#allocation2 + $0x150] sm:$0xff]
        %v1435 = vld [vmem:[#allocation2 + $0x158] sm:$0xff]
        %v1436 = vld [vmem:[#allocation2 + $0x160] sm:$0xff]
        %v1437 = vld [vmem:[#allocation2 + $0x168] sm:$0xff]
        %v1438 = vld [vmem:[#allocation2 + $0x170] sm:$0xff]
        %v1439 = vld [vmem:[#allocation2 + $0x178] sm:$0xff]
        %v1440 = vld [vmem:[#allocation2 + $0x180] sm:$0xff]
        %v1441 = vld [vmem:[#allocation2 + $0x188] sm:$0xff]
        %v1442 = vld [vmem:[#allocation2 + $0x190] sm:$0xff]
        %v1443 = vld [vmem:[#allocation2 + $0x198] sm:$0xff]
        %v1444 = vld [vmem:[#allocation2 + $0x1a0] sm:$0xff]
        %v1445 = vld [vmem:[#allocation2 + $0x1a8] sm:$0xff]
        %v1446 = vld [vmem:[#allocation2 + $0x1b0] sm:$0xff]
        %v1447 = vld [vmem:[#allocation2 + $0x1b8] sm:$0xff]
        %v1448 = vld [vmem:[#allocation2 + $0x1c0] sm:$0xff]
        %v1449 = vld [vmem:[#allocation2 + $0x1c8] sm:$0xff]
        %v1450 = vld [vmem:[#allocation2 + $0x1d0] sm:$0xff]
        %v1451 = vld [vmem:[#allocation2 + $0x1d8] sm:$0xff]
        %v1452 = vld [vmem:[#allocation2 + $0x1e0] sm:$0xff]
        %v1453 = vld [vmem:[#allocation2 + $0x1e8] sm:$0xff]
        %v1454 = vld [vmem:[#allocation2 + $0x1f0] sm:$0xff]
        %v1455 = vld [vmem:[#allocation2 + $0x1f8] sm:$0xff]
        %v1456 = vld [vmem:[%s295] sm:$0x1]
        %v1458 = vlaneseq
        %v1459 = vshrl.u32 %v1458, 7
        %v1460 = vsub.s32 0, %v1459
        %v1461 = vrot.slane %v1456, %v1460
        %v1463 = vmul.f32 %v1392, %v1461
        %v1464 = vmul.f32 %v1393, %v1461
        %v1465 = vmul.f32 %v1394, %v1461
        %v1466 = vmul.f32 %v1395, %v1461
        %v1467 = vmul.f32 %v1396, %v1461
        %v1468 = vmul.f32 %v1397, %v1461
        %v1469 = vmul.f32 %v1398, %v1461
        %v1470 = vmul.f32 %v1399, %v1461
        %v1471 = vmul.f32 %v1400, %v1461
        %v1472 = vmul.f32 %v1401, %v1461
        %v1473 = vmul.f32 %v1402, %v1461
        %v1474 = vmul.f32 %v1403, %v1461
        %v1475 = vmul.f32 %v1404, %v1461
        %v1476 = vmul.f32 %v1405, %v1461
        %v1477 = vmul.f32 %v1406, %v1461
        %v1478 = vmul.f32 %v1407, %v1461
        %v1479 = vmul.f32 %v1408, %v1461
        %v1480 = vmul.f32 %v1409, %v1461
        %v1481 = vmul.f32 %v1410, %v1461
        %v1482 = vmul.f32 %v1411, %v1461
        %v1483 = vmul.f32 %v1412, %v1461
        %v1484 = vmul.f32 %v1413, %v1461
        %v1485 = vmul.f32 %v1414, %v1461
        %v1486 = vmul.f32 %v1415, %v1461
        %v1487 = vmul.f32 %v1416, %v1461
        %v1488 = vmul.f32 %v1417, %v1461
        %v1489 = vmul.f32 %v1418, %v1461
        %v1490 = vmul.f32 %v1419, %v1461
        %v1491 = vmul.f32 %v1420, %v1461
        %v1492 = vmul.f32 %v1421, %v1461
        %v1493 = vmul.f32 %v1422, %v1461
        %v1494 = vmul.f32 %v1423, %v1461
        %v1495 = vmul.f32 %v1424, %v1461
        %v1496 = vmul.f32 %v1425, %v1461
        %v1497 = vmul.f32 %v1426, %v1461
        %v1498 = vmul.f32 %v1427, %v1461
        %v1499 = vmul.f32 %v1428, %v1461
        %v1500 = vmul.f32 %v1429, %v1461
        %v1501 = vmul.f32 %v1430, %v1461
        %v1502 = vmul.f32 %v1431, %v1461
        %v1503 = vmul.f32 %v1432, %v1461
        %v1504 = vmul.f32 %v1433, %v1461
        %v1505 = vmul.f32 %v1434, %v1461
        %v1506 = vmul.f32 %v1435, %v1461
        %v1507 = vmul.f32 %v1436, %v1461
        %v1508 = vmul.f32 %v1437, %v1461
        %v1509 = vmul.f32 %v1438, %v1461
        %v1510 = vmul.f32 %v1439, %v1461
        %v1511 = vmul.f32 %v1440, %v1461
        %v1512 = vmul.f32 %v1441, %v1461
        %v1513 = vmul.f32 %v1442, %v1461
        %v1514 = vmul.f32 %v1443, %v1461
        %v1515 = vmul.f32 %v1444, %v1461
        %v1516 = vmul.f32 %v1445, %v1461
        %v1517 = vmul.f32 %v1446, %v1461
        %v1518 = vmul.f32 %v1447, %v1461
        %v1519 = vmul.f32 %v1448, %v1461
        %v1520 = vmul.f32 %v1449, %v1461
        %v1521 = vmul.f32 %v1450, %v1461
        %v1522 = vmul.f32 %v1451, %v1461
        %v1523 = vmul.f32 %v1452, %v1461
        %v1524 = vmul.f32 %v1453, %v1461
        %v1525 = vmul.f32 %v1454, %v1461
        %v1526 = vmul.f32 %v1455, %v1461
        %v1527 = vld [vmem:[%s298] sm:$0x1]
        %v1529 = vlaneseq
        %v1530 = vshrl.u32 %v1529, 7
        %v1531 = vsub.s32 0, %v1530
        %v1532 = vrot.slane %v1527, %v1531
        %v1534 = vadd.f32 %v1463, %v1532
        %v1535 = vadd.f32 %v1464, %v1532
        %v1536 = vadd.f32 %v1465, %v1532
        %v1537 = vadd.f32 %v1466, %v1532
        %v1538 = vadd.f32 %v1467, %v1532
        %v1539 = vadd.f32 %v1468, %v1532
        %v1540 = vadd.f32 %v1469, %v1532
        %v1541 = vadd.f32 %v1470, %v1532
        %v1542 = vadd.f32 %v1471, %v1532
        %v1543 = vadd.f32 %v1472, %v1532
        %v1544 = vadd.f32 %v1473, %v1532
        %v1545 = vadd.f32 %v1474, %v1532
        %v1546 = vadd.f32 %v1475, %v1532
        %v1547 = vadd.f32 %v1476, %v1532
        %v1548 = vadd.f32 %v1477, %v1532
        %v1549 = vadd.f32 %v1478, %v1532
        %v1550 = vadd.f32 %v1479, %v1532
        %v1551 = vadd.f32 %v1480, %v1532
        %v1552 = vadd.f32 %v1481, %v1532
        %v1553 = vadd.f32 %v1482, %v1532
        %v1554 = vadd.f32 %v1483, %v1532
        %v1555 = vadd.f32 %v1484, %v1532
        %v1556 = vadd.f32 %v1485, %v1532
        %v1557 = vadd.f32 %v1486, %v1532
        %v1558 = vadd.f32 %v1487, %v1532
        %v1559 = vadd.f32 %v1488, %v1532
        %v1560 = vadd.f32 %v1489, %v1532
        %v1561 = vadd.f32 %v1490, %v1532
        %v1562 = vadd.f32 %v1491, %v1532
        %v1563 = vadd.f32 %v1492, %v1532
        %v1564 = vadd.f32 %v1493, %v1532
        %v1565 = vadd.f32 %v1494, %v1532
        %v1566 = vadd.f32 %v1495, %v1532
        %v1567 = vadd.f32 %v1496, %v1532
        %v1568 = vadd.f32 %v1497, %v1532
        %v1569 = vadd.f32 %v1498, %v1532
        %v1570 = vadd.f32 %v1499, %v1532
        %v1571 = vadd.f32 %v1500, %v1532
        %v1572 = vadd.f32 %v1501, %v1532
        %v1573 = vadd.f32 %v1502, %v1532
        %v1574 = vadd.f32 %v1503, %v1532
        %v1575 = vadd.f32 %v1504, %v1532
        %v1576 = vadd.f32 %v1505, %v1532
        %v1577 = vadd.f32 %v1506, %v1532
        %v1578 = vadd.f32 %v1507, %v1532
        %v1579 = vadd.f32 %v1508, %v1532
        %v1580 = vadd.f32 %v1509, %v1532
        %v1581 = vadd.f32 %v1510, %v1532
        %v1582 = vadd.f32 %v1511, %v1532
        %v1583 = vadd.f32 %v1512, %v1532
        %v1584 = vadd.f32 %v1513, %v1532
        %v1585 = vadd.f32 %v1514, %v1532
        %v1586 = vadd.f32 %v1515, %v1532
        %v1587 = vadd.f32 %v1516, %v1532
        %v1588 = vadd.f32 %v1517, %v1532
        %v1589 = vadd.f32 %v1518, %v1532
        %v1590 = vadd.f32 %v1519, %v1532
        %v1591 = vadd.f32 %v1520, %v1532
        %v1592 = vadd.f32 %v1521, %v1532
        %v1593 = vadd.f32 %v1522, %v1532
        %v1594 = vadd.f32 %v1523, %v1532
        %v1595 = vadd.f32 %v1524, %v1532
        %v1596 = vadd.f32 %v1525, %v1532
        %v1597 = vadd.f32 %v1526, %v1532
        %v1598 = vmax.f32 %v1534, 0.0
        %v1599 = vmax.f32 %v1535, 0.0
        %v1600 = vmax.f32 %v1536, 0.0
        %v1601 = vmax.f32 %v1537, 0.0
        %v1602 = vmax.f32 %v1538, 0.0
        %v1603 = vmax.f32 %v1539, 0.0
        %v1604 = vmax.f32 %v1540, 0.0
        %v1605 = vmax.f32 %v1541, 0.0
        %v1606 = vmax.f32 %v1542, 0.0
        %v1607 = vmax.f32 %v1543, 0.0
        %v1608 = vmax.f32 %v1544, 0.0
        %v1609 = vmax.f32 %v1545, 0.0
        %v1610 = vmax.f32 %v1546, 0.0
        %v1611 = vmax.f32 %v1547, 0.0
        %v1612 = vmax.f32 %v1548, 0.0
        %v1613 = vmax.f32 %v1549, 0.0
        %v1614 = vmax.f32 %v1550, 0.0
        %v1615 = vmax.f32 %v1551, 0.0
        %v1616 = vmax.f32 %v1552, 0.0
        %v1617 = vmax.f32 %v1553, 0.0
        %v1618 = vmax.f32 %v1554, 0.0
        %v1619 = vmax.f32 %v1555, 0.0
        %v1620 = vmax.f32 %v1556, 0.0
        %v1621 = vmax.f32 %v1557, 0.0
        %v1622 = vmax.f32 %v1558, 0.0
        %v1623 = vmax.f32 %v1559, 0.0
        %v1624 = vmax.f32 %v1560, 0.0
        %v1625 = vmax.f32 %v1561, 0.0
        %v1626 = vmax.f32 %v1562, 0.0
        %v1627 = vmax.f32 %v1563, 0.0
        %v1628 = vmax.f32 %v1564, 0.0
        %v1629 = vmax.f32 %v1565, 0.0
        %v1630 = vmax.f32 %v1566, 0.0
        %v1631 = vmax.f32 %v1567, 0.0
        %v1632 = vmax.f32 %v1568, 0.0
        %v1633 = vmax.f32 %v1569, 0.0
        %v1634 = vmax.f32 %v1570, 0.0
        %v1635 = vmax.f32 %v1571, 0.0
        %v1636 = vmax.f32 %v1572, 0.0
        %v1637 = vmax.f32 %v1573, 0.0
        %v1638 = vmax.f32 %v1574, 0.0
        %v1639 = vmax.f32 %v1575, 0.0
        %v1640 = vmax.f32 %v1576, 0.0
        %v1641 = vmax.f32 %v1577, 0.0
        %v1642 = vmax.f32 %v1578, 0.0
        %v1643 = vmax.f32 %v1579, 0.0
        %v1644 = vmax.f32 %v1580, 0.0
        %v1645 = vmax.f32 %v1581, 0.0
        %v1646 = vmax.f32 %v1582, 0.0
        %v1647 = vmax.f32 %v1583, 0.0
        %v1648 = vmax.f32 %v1584, 0.0
        %v1649 = vmax.f32 %v1585, 0.0
        %v1650 = vmax.f32 %v1586, 0.0
        %v1651 = vmax.f32 %v1587, 0.0
        %v1652 = vmax.f32 %v1588, 0.0
        %v1653 = vmax.f32 %v1589, 0.0
        %v1654 = vmax.f32 %v1590, 0.0
        %v1655 = vmax.f32 %v1591, 0.0
        %v1656 = vmax.f32 %v1592, 0.0
        %v1657 = vmax.f32 %v1593, 0.0
        %v1658 = vmax.f32 %v1594, 0.0
        %v1659 = vmax.f32 %v1595, 0.0
        %v1660 = vmax.f32 %v1596, 0.0
        %v1661 = vmax.f32 %v1597, 0.0
        %v1662 = vpack.c.bf16 %v1599, %v1598
        %v1663 = vpack.c.bf16 %v1601, %v1600
        %v1664 = vpack.c.bf16 %v1603, %v1602
        %v1665 = vpack.c.bf16 %v1605, %v1604
        %v1666 = vpack.c.bf16 %v1607, %v1606
        %v1667 = vpack.c.bf16 %v1609, %v1608
        %v1668 = vpack.c.bf16 %v1611, %v1610
        %v1669 = vpack.c.bf16 %v1613, %v1612
        %v1670 = vpack.c.bf16 %v1615, %v1614
        %v1671 = vpack.c.bf16 %v1617, %v1616
        %v1672 = vpack.c.bf16 %v1619, %v1618
        %v1673 = vpack.c.bf16 %v1621, %v1620
        %v1674 = vpack.c.bf16 %v1623, %v1622
        %v1675 = vpack.c.bf16 %v1625, %v1624
        %v1676 = vpack.c.bf16 %v1627, %v1626
        %v1677 = vpack.c.bf16 %v1629, %v1628
        %v1678 = vpack.c.bf16 %v1631, %v1630
        %v1679 = vpack.c.bf16 %v1633, %v1632
        %v1680 = vpack.c.bf16 %v1635, %v1634
        %v1681 = vpack.c.bf16 %v1637, %v1636
        %v1682 = vpack.c.bf16 %v1639, %v1638
        %v1683 = vpack.c.bf16 %v1641, %v1640
        %v1684 = vpack.c.bf16 %v1643, %v1642
        %v1685 = vpack.c.bf16 %v1645, %v1644
        %v1686 = vpack.c.bf16 %v1647, %v1646
        %v1687 = vpack.c.bf16 %v1649, %v1648
        %v1688 = vpack.c.bf16 %v1651, %v1650
        %v1689 = vpack.c.bf16 %v1653, %v1652
        %v1690 = vpack.c.bf16 %v1655, %v1654
        %v1691 = vpack.c.bf16 %v1657, %v1656
        %v1692 = vpack.c.bf16 %v1659, %v1658
        %v1693 = vpack.c.bf16 %v1661, %v1660
        %v1726 = vunpack.c.l.b16 %v1662
        %v1727 = vunpack.c.h.b16 %v1662
        %v1728 = vunpack.c.l.b16 %v1663
        %v1729 = vunpack.c.h.b16 %v1663
        %v1730 = vunpack.c.l.b16 %v1664
        %v1731 = vunpack.c.h.b16 %v1664
        %v1732 = vunpack.c.l.b16 %v1665
        %v1733 = vunpack.c.h.b16 %v1665
        %v1734 = vunpack.c.l.b16 %v1666
        %v1735 = vunpack.c.h.b16 %v1666
        %v1736 = vunpack.c.l.b16 %v1667
        %v1737 = vunpack.c.h.b16 %v1667
        %v1738 = vunpack.c.l.b16 %v1668
        %v1739 = vunpack.c.h.b16 %v1668
        %v1740 = vunpack.c.l.b16 %v1669
        %v1741 = vunpack.c.h.b16 %v1669
        %v1742 = vunpack.c.l.b16 %v1670
        %v1743 = vunpack.c.h.b16 %v1670
        %v1744 = vunpack.c.l.b16 %v1671
        %v1745 = vunpack.c.h.b16 %v1671
        %v1746 = vunpack.c.l.b16 %v1672
        %v1747 = vunpack.c.h.b16 %v1672
        %v1748 = vunpack.c.l.b16 %v1673
        %v1749 = vunpack.c.h.b16 %v1673
        %v1750 = vunpack.c.l.b16 %v1674
        %v1751 = vunpack.c.h.b16 %v1674
        %v1752 = vunpack.c.l.b16 %v1675
        %v1753 = vunpack.c.h.b16 %v1675
        %v1754 = vunpack.c.l.b16 %v1676
        %v1755 = vunpack.c.h.b16 %v1676
        %v1756 = vunpack.c.l.b16 %v1677
        %v1757 = vunpack.c.h.b16 %v1677
        %v1758 = vunpack.c.l.b16 %v1678
        %v1759 = vunpack.c.h.b16 %v1678
        %v1760 = vunpack.c.l.b16 %v1679
        %v1761 = vunpack.c.h.b16 %v1679
        %v1762 = vunpack.c.l.b16 %v1680
        %v1763 = vunpack.c.h.b16 %v1680
        %v1764 = vunpack.c.l.b16 %v1681
        %v1765 = vunpack.c.h.b16 %v1681
        %v1766 = vunpack.c.l.b16 %v1682
        %v1767 = vunpack.c.h.b16 %v1682
        %v1768 = vunpack.c.l.b16 %v1683
        %v1769 = vunpack.c.h.b16 %v1683
        %v1770 = vunpack.c.l.b16 %v1684
        %v1771 = vunpack.c.h.b16 %v1684
        %v1772 = vunpack.c.l.b16 %v1685
        %v1773 = vunpack.c.h.b16 %v1685
        %v1774 = vunpack.c.l.b16 %v1686
        %v1775 = vunpack.c.h.b16 %v1686
        %v1776 = vunpack.c.l.b16 %v1687
        %v1777 = vunpack.c.h.b16 %v1687
        %v1778 = vunpack.c.l.b16 %v1688
        %v1779 = vunpack.c.h.b16 %v1688
        %v1780 = vunpack.c.l.b16 %v1689
        %v1781 = vunpack.c.h.b16 %v1689
        %v1782 = vunpack.c.l.b16 %v1690
        %v1783 = vunpack.c.h.b16 %v1690
        %v1784 = vunpack.c.l.b16 %v1691
        %v1785 = vunpack.c.h.b16 %v1691
        %v1786 = vunpack.c.l.b16 %v1692
        %v1787 = vunpack.c.h.b16 %v1692
        %v1788 = vunpack.c.l.b16 %v1693
        %v1789 = vunpack.c.h.b16 %v1693
        %v1790 = vpack.c.b16 %v1726, %v1726
        %v1791 = vpack.c.b16 %v1727, %v1727
        %v1792 = vpack.c.b16 %v1728, %v1728
        %v1793 = vpack.c.b16 %v1729, %v1729
        %v1794 = vpack.c.b16 %v1730, %v1730
        %v1795 = vpack.c.b16 %v1731, %v1731
        %v1796 = vpack.c.b16 %v1732, %v1732
        %v1797 = vpack.c.b16 %v1733, %v1733
        %v1798 = vpack.c.b16 %v1734, %v1734
        %v1799 = vpack.c.b16 %v1735, %v1735
        %v1800 = vpack.c.b16 %v1736, %v1736
        %v1801 = vpack.c.b16 %v1737, %v1737
        %v1802 = vpack.c.b16 %v1738, %v1738
        %v1803 = vpack.c.b16 %v1739, %v1739
        %v1804 = vpack.c.b16 %v1740, %v1740
        %v1805 = vpack.c.b16 %v1741, %v1741
        %v1806 = vpack.c.b16 %v1742, %v1742
        %v1807 = vpack.c.b16 %v1743, %v1743
        %v1808 = vpack.c.b16 %v1744, %v1744
        %v1809 = vpack.c.b16 %v1745, %v1745
        %v1810 = vpack.c.b16 %v1746, %v1746
        %v1811 = vpack.c.b16 %v1747, %v1747
        %v1812 = vpack.c.b16 %v1748, %v1748
        %v1813 = vpack.c.b16 %v1749, %v1749
        %v1814 = vpack.c.b16 %v1750, %v1750
        %v1815 = vpack.c.b16 %v1751, %v1751
        %v1816 = vpack.c.b16 %v1752, %v1752
        %v1817 = vpack.c.b16 %v1753, %v1753
        %v1818 = vpack.c.b16 %v1754, %v1754
        %v1819 = vpack.c.b16 %v1755, %v1755
        %v1820 = vpack.c.b16 %v1756, %v1756
        %v1821 = vpack.c.b16 %v1757, %v1757
        %v1822 = vpack.c.b16 %v1758, %v1758
        %v1823 = vpack.c.b16 %v1759, %v1759
        %v1824 = vpack.c.b16 %v1760, %v1760
        %v1825 = vpack.c.b16 %v1761, %v1761
        %v1826 = vpack.c.b16 %v1762, %v1762
        %v1827 = vpack.c.b16 %v1763, %v1763
        %v1828 = vpack.c.b16 %v1764, %v1764
        %v1829 = vpack.c.b16 %v1765, %v1765
        %v1830 = vpack.c.b16 %v1766, %v1766
        %v1831 = vpack.c.b16 %v1767, %v1767
        %v1832 = vpack.c.b16 %v1768, %v1768
        %v1833 = vpack.c.b16 %v1769, %v1769
        %v1834 = vpack.c.b16 %v1770, %v1770
        %v1835 = vpack.c.b16 %v1771, %v1771
        %v1836 = vpack.c.b16 %v1772, %v1772
        %v1837 = vpack.c.b16 %v1773, %v1773
        %v1838 = vpack.c.b16 %v1774, %v1774
        %v1839 = vpack.c.b16 %v1775, %v1775
        %v1840 = vpack.c.b16 %v1776, %v1776
        %v1841 = vpack.c.b16 %v1777, %v1777
        %v1842 = vpack.c.b16 %v1778, %v1778
        %v1843 = vpack.c.b16 %v1779, %v1779
        %v1844 = vpack.c.b16 %v1780, %v1780
        %v1845 = vpack.c.b16 %v1781, %v1781
        %v1846 = vpack.c.b16 %v1782, %v1782
        %v1847 = vpack.c.b16 %v1783, %v1783
        %v1848 = vpack.c.b16 %v1784, %v1784
        %v1849 = vpack.c.b16 %v1785, %v1785
        %v1850 = vpack.c.b16 %v1786, %v1786
        %v1851 = vpack.c.b16 %v1787, %v1787
        %v1852 = vpack.c.b16 %v1788, %v1788
        %v1853 = vpack.c.b16 %v1789, %v1789
        %vm1918 = vcmask 519168
        %1919 = vst.msk [vmem:[%s306] sm:$0xf] %vm1918, %v1790
        %1920 = vst.msk [vmem:[%s306 + $0x4] sm:$0xf] %vm1918, %v1791
        %1921 = vst.msk [vmem:[%s306 + $0x8] sm:$0xf] %vm1918, %v1792
        %1922 = vst.msk [vmem:[%s306 + $0xc] sm:$0xf] %vm1918, %v1793
        %1923 = vst.msk [vmem:[%s306 + $0x10] sm:$0xf] %vm1918, %v1794
        %1924 = vst.msk [vmem:[%s306 + $0x14] sm:$0xf] %vm1918, %v1795
        %1925 = vst.msk [vmem:[%s306 + $0x18] sm:$0xf] %vm1918, %v1796
        %1926 = vst.msk [vmem:[%s306 + $0x1c] sm:$0xf] %vm1918, %v1797
        %1927 = vst.msk [vmem:[%s306 + $0x20] sm:$0xf] %vm1918, %v1798
        %1928 = vst.msk [vmem:[%s306 + $0x24] sm:$0xf] %vm1918, %v1799
        %1929 = vst.msk [vmem:[%s306 + $0x28] sm:$0xf] %vm1918, %v1800
        %1930 = vst.msk [vmem:[%s306 + $0x2c] sm:$0xf] %vm1918, %v1801
        %1931 = vst.msk [vmem:[%s306 + $0x30] sm:$0xf] %vm1918, %v1802
        %1932 = vst.msk [vmem:[%s306 + $0x34] sm:$0xf] %vm1918, %v1803
        %1933 = vst.msk [vmem:[%s306 + $0x38] sm:$0xf] %vm1918, %v1804
        %1934 = vst.msk [vmem:[%s306 + $0x3c] sm:$0xf] %vm1918, %v1805
        %1935 = vst.msk [vmem:[%s306 + $0x40] sm:$0xf] %vm1918, %v1806
        %1936 = vst.msk [vmem:[%s306 + $0x44] sm:$0xf] %vm1918, %v1807
        %1937 = vst.msk [vmem:[%s306 + $0x48] sm:$0xf] %vm1918, %v1808
        %1938 = vst.msk [vmem:[%s306 + $0x4c] sm:$0xf] %vm1918, %v1809
        %1939 = vst.msk [vmem:[%s306 + $0x50] sm:$0xf] %vm1918, %v1810
        %1940 = vst.msk [vmem:[%s306 + $0x54] sm:$0xf] %vm1918, %v1811
        %1941 = vst.msk [vmem:[%s306 + $0x58] sm:$0xf] %vm1918, %v1812
        %1942 = vst.msk [vmem:[%s306 + $0x5c] sm:$0xf] %vm1918, %v1813
        %1943 = vst.msk [vmem:[%s306 + $0x60] sm:$0xf] %vm1918, %v1814
        %1944 = vst.msk [vmem:[%s306 + $0x64] sm:$0xf] %vm1918, %v1815
        %1945 = vst.msk [vmem:[%s306 + $0x68] sm:$0xf] %vm1918, %v1816
        %1946 = vst.msk [vmem:[%s306 + $0x6c] sm:$0xf] %vm1918, %v1817
        %1947 = vst.msk [vmem:[%s306 + $0x70] sm:$0xf] %vm1918, %v1818
        %1948 = vst.msk [vmem:[%s306 + $0x74] sm:$0xf] %vm1918, %v1819
        %1949 = vst.msk [vmem:[%s306 + $0x78] sm:$0xf] %vm1918, %v1820
        %1950 = vst.msk [vmem:[%s306 + $0x7c] sm:$0xf] %vm1918, %v1821
        %1951 = vst.msk [vmem:[%s306 + $0x80] sm:$0xf] %vm1918, %v1822
        %1952 = vst.msk [vmem:[%s306 + $0x84] sm:$0xf] %vm1918, %v1823
        %1953 = vst.msk [vmem:[%s306 + $0x88] sm:$0xf] %vm1918, %v1824
        %1954 = vst.msk [vmem:[%s306 + $0x8c] sm:$0xf] %vm1918, %v1825
        %1955 = vst.msk [vmem:[%s306 + $0x90] sm:$0xf] %vm1918, %v1826
        %1956 = vst.msk [vmem:[%s306 + $0x94] sm:$0xf] %vm1918, %v1827
        %1957 = vst.msk [vmem:[%s306 + $0x98] sm:$0xf] %vm1918, %v1828
        %1958 = vst.msk [vmem:[%s306 + $0x9c] sm:$0xf] %vm1918, %v1829
        %1959 = vst.msk [vmem:[%s306 + $0xa0] sm:$0xf] %vm1918, %v1830
        %1960 = vst.msk [vmem:[%s306 + $0xa4] sm:$0xf] %vm1918, %v1831
        %1961 = vst.msk [vmem:[%s306 + $0xa8] sm:$0xf] %vm1918, %v1832
        %1962 = vst.msk [vmem:[%s306 + $0xac] sm:$0xf] %vm1918, %v1833
        %1963 = vst.msk [vmem:[%s306 + $0xb0] sm:$0xf] %vm1918, %v1834
        %1964 = vst.msk [vmem:[%s306 + $0xb4] sm:$0xf] %vm1918, %v1835
        %1965 = vst.msk [vmem:[%s306 + $0xb8] sm:$0xf] %vm1918, %v1836
        %1966 = vst.msk [vmem:[%s306 + $0xbc] sm:$0xf] %vm1918, %v1837
        %1967 = vst.msk [vmem:[%s306 + $0xc0] sm:$0xf] %vm1918, %v1838
        %1968 = vst.msk [vmem:[%s306 + $0xc4] sm:$0xf] %vm1918, %v1839
        %1969 = vst.msk [vmem:[%s306 + $0xc8] sm:$0xf] %vm1918, %v1840
        %1970 = vst.msk [vmem:[%s306 + $0xcc] sm:$0xf] %vm1918, %v1841
        %1971 = vst.msk [vmem:[%s306 + $0xd0] sm:$0xf] %vm1918, %v1842
        %1972 = vst.msk [vmem:[%s306 + $0xd4] sm:$0xf] %vm1918, %v1843
        %1973 = vst.msk [vmem:[%s306 + $0xd8] sm:$0xf] %vm1918, %v1844
        %1974 = vst.msk [vmem:[%s306 + $0xdc] sm:$0xf] %vm1918, %v1845
        %1975 = vst.msk [vmem:[%s306 + $0xe0] sm:$0xf] %vm1918, %v1846
        %1976 = vst.msk [vmem:[%s306 + $0xe4] sm:$0xf] %vm1918, %v1847
        %1977 = vst.msk [vmem:[%s306 + $0xe8] sm:$0xf] %vm1918, %v1848
        %1978 = vst.msk [vmem:[%s306 + $0xec] sm:$0xf] %vm1918, %v1849
        %1979 = vst.msk [vmem:[%s306 + $0xf0] sm:$0xf] %vm1918, %v1850
        %1980 = vst.msk [vmem:[%s306 + $0xf4] sm:$0xf] %vm1918, %v1851
        %1981 = vst.msk [vmem:[%s306 + $0xf8] sm:$0xf] %vm1918, %v1852
        %1982 = vst.msk [vmem:[%s306 + $0xfc] sm:$0xf] %vm1918, %v1853
      $region44: #{tpu_custom_call.1} parent=35 // pred_fallthru
        _
      %s1983 = smul.u32 64, %s20
      %p1984 = scmp.lt.s32.totalorder %s1983, 255
      %s1985 = scalar_select %p1984, %s1983, 255
      %p1986 = scmp.lt.s32.totalorder %s21, 0
      %s1987 = scalar_select %p1986, %s21, 0
      %s1988 = sadd.s32 %s1987, %s1985
      %s1989 = smul.addr %s1988, 4
      %s1990 = scalar_lea.vmem %s4, %s1989
      // Predicated region
      $region45: #{tpu_custom_call.1} parent=35 // pred_check
        %p1991 = pneg %p162
      $region46: #{tpu_custom_call.1} parent=35 // pred_check_branch
        %1993 = sbr.rel (%p1991) target = $region48
      $region47: #{tpu_custom_call.1} parent=35 // pred_region
        %s1994 = smul.u32 64, %s20
      $region48: #{tpu_custom_call.1} parent=35 // pred_fallthru
        _
    $region36: #{tpu_custom_call.1} parent=5 // pred_fallthru
      _
    %p1995 = scmp.le.s32.totalorder 2, %s10
    // Predicated region
    $region49: #{tpu_custom_call.1} parent=5 // pred_check
      %p1996 = pneg %p1995
    $region50: #{tpu_custom_call.1} parent=5 // pred_check_branch
      %1998 = sbr.rel (%p1996) target = $region52
    $region51: #{tpu_custom_call.1} parent=5 // pred_region
      %s1999 = ssub.s32 %s10, 2
      // Predicated region
      $region53: #{tpu_custom_call.1} parent=51 // pred_check
        %p2000 = pneg %p168
      $region54: #{tpu_custom_call.1} parent=51 // pred_check_branch
        %2002 = sbr.rel (%p2000) target = $region56
      $region55: #{tpu_custom_call.1} parent=51 // pred_region
        %s2003 = smul.u32 64, %s23
        %p2004 = scmp.lt.s32.totalorder %s2003, 255
        %s2005 = scalar_select %p2004, %s2003, 255
        %p2006 = scmp.lt.s32.totalorder %s24, 0
        %s2007 = scalar_select %p2006, %s24, 0
        %s2008 = sadd.s32 %s2007, %s2005
        %s2009 = smul.addr %s2008, 4
        %s2010 = scalar_lea.vmem %s4, %s2009
      $region56: #{tpu_custom_call.1} parent=51 // pred_fallthru
        _
    $region52: #{tpu_custom_call.1} parent=5 // pred_fallthru
      _
  $region6: #{tpu_custom_call.1} parent=0 // loop_footer
    %s14 = sadd.s32 1, %s10
  $region7: #{tpu_custom_call.1} parent=0 // loop_footer_branch
    %9 = sbr.rel target = $region3
  $region8: #{tpu_custom_call.1} parent=0 // loop_exit
    _

</llo_original>
